<compile_context>
chip_gen: v6e
topology: v6e:2x2x1
jax: 0.10.0
libtpu: 0.0.40
codegen_flags: <defaults>
</compile_context>

<pallas_src>
import functools

import jax
import jax.numpy as jnp
from jax import lax
from jax.experimental import pallas as pl
from jax.experimental.pallas import tpu as pltpu

NEG_SLOPE = 0.2
MASK_VAL = -1e30
BN_EPS = 1e-5

_VMEM = pl.BlockSpec(memory_space=pltpu.MemorySpace.VMEM)


# ---------------------------------------------------------------------------
# In-kernel building blocks
# ---------------------------------------------------------------------------
def _head_attention(a_dst, a_src, mask_bias, xp_h):
    """One attention head: masked softmax over src + feature aggregation.

    a_dst     : [N, 1] f32   per-dst attention score
    a_src     : [1, N] f32   per-src attention score
    mask_bias : [N, N] f32   additive mask (0 on edges incl. self loops, -1e30 off)
    xp_h      : [N, F] bf16  per-head transformed features
    returns   : [N, F] f32   softmax(logits) @ xp_h
    """
    raw = a_dst + a_src                                   # [N, N]
    raw = jnp.maximum(raw, NEG_SLOPE * raw)               # LeakyReLU (PyG order: before mask)
    logits = raw + mask_bias
    m = jnp.max(logits, axis=-1, keepdims=True)
    p = jnp.exp(logits - m)                               # unnormalized probs
    inv = pl.reciprocal(jnp.sum(p, axis=-1, keepdims=True), approx=True)
    # Deferred normalization: scale the small [N, F] matmul output, not p.
    agg = jnp.dot(p.astype(jnp.bfloat16), xp_h, preferred_element_type=jnp.float32)
    return inv * agg


def _gat_conv_multi(h_bf, w_ref, att_ref, mask_bias, xp_sc, o_sc, *, heads, f_out):
    """Multi-head GATConv (no bias; bias is folded into the following BN shift).

    h_bf   : [N, Fin] bf16
    w_ref  : [Fin, H*F] bf16
    att_ref: [H*F, 2H] bf16 block-diagonal (cols 0..H-1 = att_src, H..2H-1 = att_dst)
    xp_sc  : VMEM scratch [H, N, F] bf16
    o_sc   : VMEM scratch [H, N, F] f32
    returns: [N, H*F] f32
    """
    xp = jnp.dot(h_bf, w_ref[...], preferred_element_type=jnp.float32)       # [N, H*F] MXU
    xp_bf = xp.astype(jnp.bfloat16)
    alpha = jnp.dot(xp_bf, att_ref[...], preferred_element_type=jnp.float32)  # [N, 2H]  MXU
    alpha_dst = alpha[:, heads:2 * heads]                                      # [N, H]
    alpha_src_t = jnp.transpose(alpha[:, :heads])                              # [H, N] one XLU transpose/layer

    # Stage per-head feature slices (static lane slices) so the head loop only
    # needs dynamic leading-axis indexing.
    for hd in range(heads):
        xp_sc[hd] = xp_bf[:, hd * f_out:(hd + 1) * f_out]

    iota_row = lax.broadcasted_iota(jnp.int32, (1, heads), 1)   # [1, H]
    iota_col = lax.broadcasted_iota(jnp.int32, (heads, 1), 0)   # [H, 1]

    def head_body(hd, carry):
        # One-hot selection of this head's attention coefficients (cheap N*H
        # reduce; avoids dynamic lane slicing).
        a_dst = jnp.sum(jnp.where(iota_row == hd, alpha_dst, 0.0),
                        axis=-1, keepdims=True)                  # [N, 1]
        a_src = jnp.sum(jnp.where(iota_col == hd, alpha_src_t, 0.0),
                        axis=0, keepdims=True)                   # [1, N]
        o_sc[hd] = _head_attention(a_dst, a_src, mask_bias, xp_sc[hd])
        return carry

    lax.fori_loop(0, heads, head_body, 0)

    # Lane-dense assembly of head outputs (O(N*H*F), small vs the N^2 work).
    return jnp.concatenate([o_sc[hd] for hd in range(heads)], axis=-1)


def _gat_conv_single(h_bf, w_ref, att_ref, bias_ref, mask_bias):
    """Single-head GATConv (final layer) with bias."""
    xp = jnp.dot(h_bf, w_ref[...], preferred_element_type=jnp.float32)        # [N, F]
    xp_bf = xp.astype(jnp.bfloat16)
    alpha = jnp.dot(xp_bf, att_ref[...], preferred_element_type=jnp.float32)  # [N, 2]
    a_dst = alpha[:, 1:2]                                                       # [N, 1]
    a_src = jnp.transpose(alpha[:, 0:1])                                        # [1, N]
    out = _head_attention(a_dst, a_src, mask_bias, xp_bf)
    return out + bias_ref[...]


def gat_fused_kernel(*refs, heads, f_outs):
    """Whole GAT forward (4x GATConv + 3x BN(eval)+ELU + log_softmax)."""
    (x_ref, mask_ref,
     w1, a1, s1, t1,
     w2, a2, s2, t2,
     w3, a3, s3, t3,
     w4, a4, b4,
     out_ref,
     xp1_sc, o1_sc, xp2_sc, o2_sc, xp3_sc, o3_sc) = refs

    # Additive mask, upcast once and shared by every head of every layer.
    mask_bias = mask_ref[...].astype(jnp.float32)                # [N, N]

    h_bf = x_ref[...]                                            # bf16 input features
    layers = ((w1, a1, s1, t1, xp1_sc, o1_sc),
              (w2, a2, s2, t2, xp2_sc, o2_sc),
              (w3, a3, s3, t3, xp3_sc, o3_sc))
    for i, (w, a, s, t, xp_sc, o_sc) in enumerate(layers):
        out = _gat_conv_multi(h_bf, w, a, mask_bias, xp_sc, o_sc,
                              heads=heads[i], f_out=f_outs[i])
        # BN(eval) with the conv bias folded into the shift, then ELU.
        y = out * s[...] + t[...]
        y = jnp.where(y > 0, y, jnp.exp(jnp.minimum(y, 0.0)) - 1.0)
        h_bf = y.astype(jnp.bfloat16)

    h = _gat_conv_single(h_bf, w4, a4, b4, mask_bias)            # [N, n_out] f32

    # log_softmax over classes (exact, f32).
    m = jnp.max(h, axis=-1, keepdims=True)
    sft = h - m
    lse = jnp.log(jnp.sum(jnp.exp(sft), axis=-1, keepdims=True))
    out_ref[...] = sft - lse                                     # single full-width store


# ---------------------------------------------------------------------------
# Wrapper
# ---------------------------------------------------------------------------
def _build_att_mat(att_src, att_dst):
    """Block-diagonal [H*F, 2H] matrix so alpha = xp @ att_mat yields all
    per-head (src, dst) attention scores with one MXU matmul."""
    h, f = att_src.shape
    eye = jnp.eye(h, dtype=jnp.float32)
    src_mat = (att_src[:, :, None] * eye[:, None, :]).reshape(h * f, h)
    dst_mat = (att_dst[:, :, None] * eye[:, None, :]).reshape(h * f, h)
    return jnp.concatenate([src_mat, dst_mat], axis=1)


def _vmem_limit_bytes():
    """~75% of the chip's physical VMEM: ~96 MiB on v5e/v6e, ~48 MiB on v7x."""
    cap = 128 * 1024 * 1024
    try:
        cap = int(getattr(pltpu.get_tpu_info(), "vmem_capacity_bytes", cap))
    except Exception:
        pass
    return max(32 * 1024 * 1024, min(100 * 1024 * 1024, (cap * 3) // 4))


def gat_forward(params, x, adj, *, heads, dims):
    """heads / dims are static Python tuples (bound via functools.partial)."""
    n = x.shape[0]
    n_out = heads[3] * dims[3]

    # Precomputed additive mask, shipped in bf16 (halves the N^2 DMA).
    mask_bias = ((1.0 - adj) * MASK_VAL).astype(jnp.bfloat16)

    args = [x.astype(jnp.bfloat16), mask_bias]
    for i, name in enumerate(("conv1", "conv2", "conv3")):
        c = params[name]
        bn = params[f"bn{i + 1}"]
        scale = bn["gamma"] * lax.rsqrt(bn["var"] + BN_EPS)
        # conv bias folded into the BN shift: (out + b)*s + t == out*s + (b*s + t)
        shift = bn["beta"] - bn["mean"] * scale + c["bias"] * scale
        args += [c["w"].astype(jnp.bfloat16),
                 _build_att_mat(c["att_src"], c["att_dst"]).astype(jnp.bfloat16),
                 scale.reshape(1, -1), shift.reshape(1, -1)]
    c4 = params["conv4"]
    args += [c4["w"].astype(jnp.bfloat16),
             _build_att_mat(c4["att_src"], c4["att_dst"]).astype(jnp.bfloat16),
             c4["bias"].reshape(1, -1)]

    scratch = []
    for i in range(3):  # per-layer exact-shape scratches (full-block dyn indexing)
        scratch += [pltpu.VMEM((heads[i], n, dims[i]), jnp.bfloat16),  # staged xp slices
                    pltpu.VMEM((heads[i], n, dims[i]), jnp.float32)]   # per-head outputs

    kernel = functools.partial(gat_fused_kernel, heads=heads, f_outs=dims)
    return pl.pallas_call(
        kernel,
        out_shape=jax.ShapeDtypeStruct((n, n_out), jnp.float32),
        in_specs=[_VMEM] * len(args),
        out_specs=_VMEM,
        scratch_shapes=scratch,
        compiler_params=pltpu.CompilerParams(
            vmem_limit_bytes=_vmem_limit_bytes()),
    )(*args)


# ---------------------------------------------------------------------------
# Params / graph construction
# ---------------------------------------------------------------------------
def init_gatconv(key, f_in, f_out, heads):
    k1, k2, k3 = jax.random.split(key, 3)
    glorot = lambda k, shape: jax.random.normal(k, shape, jnp.float32) * \
        jnp.sqrt(2.0 / (shape[0] + shape[-1]))
    return {
        "w": glorot(k1, (f_in, heads * f_out)),
        "att_src": glorot(k2, (heads, f_out)),
        "att_dst": glorot(k3, (heads, f_out)),
        "bias": jnp.zeros((heads * f_out,), jnp.float32),
    }


def init_bn(c):
    return {
        "gamma": jnp.ones((c,), jnp.float32),
        "beta": jnp.zeros((c,), jnp.float32),
        "mean": jnp.zeros((c,), jnp.float32),
        "var": jnp.ones((c,), jnp.float32),
    }


def init_gat_params(key, n_in, n_hid, n_out, heads=8):
    h2 = max(1, heads // 2)
    h3 = max(1, heads // 4)
    keys = jax.random.split(key, 4)
    params = {
        "conv1": init_gatconv(keys[0], n_in, n_hid, heads),
        "bn1": init_bn(n_hid * heads),
        "conv2": init_gatconv(keys[1], n_hid * heads, n_hid, h2),
        "bn2": init_bn(n_hid * h2),
        "conv3": init_gatconv(keys[2], n_hid * h2, n_hid, h3),
        "bn3": init_bn(n_hid * h3),
        "conv4": init_gatconv(keys[3], n_hid * h3, n_out, 1),
    }
    heads_cfg = (heads, h2, h3, 1)          # static Python ints (NOT in pytree)
    dims_cfg = (n_hid, n_hid, n_hid, n_out)
    return params, heads_cfg, dims_cfg


def build_dense_adj(edge_index, n):
    # adj[dst, src] = 1 for every edge (src -> dst); add self loops so every
    # row has at least one valid entry (keeps the masked softmax well-defined).
    adj = jnp.zeros((n, n), jnp.float32)
    adj = adj.at[edge_index[1], edge_index[0]].set(1.0)
    adj = jnp.maximum(adj, jnp.eye(n, dtype=jnp.float32))
    return adj


# ---------------------------------------------------------------------------
if __name__ == "__main__":
    N_NODES, N_IN, N_HID, N_OUT, HEADS = 16, 16, 8, 4, 8

    key = jax.random.PRNGKey(0)
    kx, kp = jax.random.split(key)
    x = jax.random.normal(kx, (N_NODES, N_IN), jnp.float32)

    # Deterministic edge list: each node i -> (i+1), (i+3), (i+5) mod N
    src = jnp.concatenate([jnp.arange(N_NODES, dtype=jnp.int32)] * 3)
    dst = jnp.concatenate([
        (jnp.arange(N_NODES, dtype=jnp.int32) + off) % N_NODES for off in (1, 3, 5)
    ])
    edge_index = jnp.stack([src, dst], axis=0)  # [2, 48]

    adj = build_dense_adj(edge_index, N_NODES)
    params, heads_cfg, dims_cfg = init_gat_params(kp, N_IN, N_HID, N_OUT, heads=HEADS)

    forward = jax.jit(functools.partial(gat_forward, heads=heads_cfg, dims=dims_cfg))
    out = forward(params, x, adj)
    out = jax.block_until_ready(out)

    assert out.shape == (N_NODES, N_OUT)
    assert bool(jnp.all(jnp.isfinite(out)))
    # rows of log_softmax should exp-sum to 1
    assert bool(jnp.allclose(jnp.sum(jnp.exp(out), axis=1), 1.0, atol=1e-4))
    print("KERNEL_OK")
</pallas_src>

<mosaic_0001>
module attributes {stable_mosaic.version = 11 : i64} {
  func.func @gat_fused_kernel(%arg0: memref<16x16xbf16, #tpu.memory_space<vmem>>, %arg1: memref<16x16xbf16, #tpu.memory_space<vmem>>, %arg2: memref<16x64xbf16, #tpu.memory_space<vmem>>, %arg3: memref<64x16xbf16, #tpu.memory_space<vmem>>, %arg4: memref<1x64xf32, #tpu.memory_space<vmem>>, %arg5: memref<1x64xf32, #tpu.memory_space<vmem>>, %arg6: memref<64x32xbf16, #tpu.memory_space<vmem>>, %arg7: memref<32x8xbf16, #tpu.memory_space<vmem>>, %arg8: memref<1x32xf32, #tpu.memory_space<vmem>>, %arg9: memref<1x32xf32, #tpu.memory_space<vmem>>, %arg10: memref<32x16xbf16, #tpu.memory_space<vmem>>, %arg11: memref<16x4xbf16, #tpu.memory_space<vmem>>, %arg12: memref<1x16xf32, #tpu.memory_space<vmem>>, %arg13: memref<1x16xf32, #tpu.memory_space<vmem>>, %arg14: memref<16x4xbf16, #tpu.memory_space<vmem>>, %arg15: memref<4x2xbf16, #tpu.memory_space<vmem>>, %arg16: memref<1x4xf32, #tpu.memory_space<vmem>>, %arg17: memref<16x4xf32, #tpu.memory_space<vmem>>, %arg18: memref<8x16x8xbf16, #tpu.memory_space<vmem>>, %arg19: memref<8x16x8xf32, #tpu.memory_space<vmem>>, %arg20: memref<4x16x8xbf16, #tpu.memory_space<vmem>>, %arg21: memref<4x16x8xf32, #tpu.memory_space<vmem>>, %arg22: memref<2x16x8xbf16, #tpu.memory_space<vmem>>, %arg23: memref<2x16x8xf32, #tpu.memory_space<vmem>>) attributes {dimension_semantics = [], scalar_prefetch = 0 : i64, scratch_operands = 6 : i64, tpu.core_type = #tpu.core_type<tc>} {
    %c0 = arith.constant 0 : index
    %c0_0 = arith.constant 0 : index
    %0 = vector.load %arg1[%c0, %c0_0] : memref<16x16xbf16, #tpu.memory_space<vmem>>, vector<16x16xbf16>
    %1 = arith.extf %0 : vector<16x16xbf16> to vector<16x16xf32>
    %c0_1 = arith.constant 0 : index
    %c0_2 = arith.constant 0 : index
    %2 = vector.load %arg0[%c0_1, %c0_2] : memref<16x16xbf16, #tpu.memory_space<vmem>>, vector<16x16xbf16>
    %c0_3 = arith.constant 0 : index
    %c0_4 = arith.constant 0 : index
    %3 = vector.load %arg2[%c0_3, %c0_4] : memref<16x64xbf16, #tpu.memory_space<vmem>>, vector<16x64xbf16>
    %cst = arith.constant dense<0.000000e+00> : vector<16x64xf32>
    %4 = tpu.matmul %2, %3, %cst {dimension_numbers = #tpu.dot_dimension_numbers<[1], [0], [0], [1], [0, 0, 1, 1], [], []>} : vector<16x16xbf16>, vector<16x64xbf16>, vector<16x64xf32> -> vector<16x64xf32>
    %5 = arith.truncf %4 : vector<16x64xf32> to vector<16x64xbf16>
    %c0_5 = arith.constant 0 : index
    %c0_6 = arith.constant 0 : index
    %6 = vector.load %arg3[%c0_5, %c0_6] : memref<64x16xbf16, #tpu.memory_space<vmem>>, vector<64x16xbf16>
    %cst_7 = arith.constant dense<0.000000e+00> : vector<16x16xf32>
    %7 = tpu.matmul %5, %6, %cst_7 {dimension_numbers = #tpu.dot_dimension_numbers<[1], [0], [0], [1], [0, 0, 1, 1], [], []>} : vector<16x64xbf16>, vector<64x16xbf16>, vector<16x16xf32> -> vector<16x16xf32>
    %8 = vector.extract_strided_slice %7 {offsets = [0, 8], sizes = [16, 8], strides = [1, 1]} : vector<16x16xf32> to vector<16x8xf32>
    %9 = vector.extract_strided_slice %7 {offsets = [0, 0], sizes = [16, 8], strides = [1, 1]} : vector<16x16xf32> to vector<16x8xf32>
    %10 = tpu.transpose %9, [1, 0] : vector<16x8xf32> -> vector<8x16xf32>
    %11 = vector.extract_strided_slice %5 {offsets = [0, 0], sizes = [16, 8], strides = [1, 1]} : vector<16x64xbf16> to vector<16x8xbf16>
    %c0_8 = arith.constant 0 : index
    %c0_9 = arith.constant 0 : index
    %c0_10 = arith.constant 0 : index
    %12 = vector.load %arg18[%c0_8, %c0_9, %c0_10] : memref<8x16x8xbf16, #tpu.memory_space<vmem>>, vector<1x16x8xbf16>
    %13 = vector.shape_cast %12 : vector<1x16x8xbf16> to vector<16x8xbf16>
    %14 = vector.shape_cast %11 : vector<16x8xbf16> to vector<1x16x8xbf16>
    tpu.vector_store %arg18[%c0_8, %c0_9, %c0_10], %14 {strides = array<i32>} : memref<8x16x8xbf16, #tpu.memory_space<vmem>>, vector<1x16x8xbf16>,
    %15 = vector.extract_strided_slice %5 {offsets = [0, 8], sizes = [16, 8], strides = [1, 1]} : vector<16x64xbf16> to vector<16x8xbf16>
    %c1 = arith.constant 1 : index
    %c0_11 = arith.constant 0 : index
    %c0_12 = arith.constant 0 : index
    %16 = vector.load %arg18[%c1, %c0_11, %c0_12] : memref<8x16x8xbf16, #tpu.memory_space<vmem>>, vector<1x16x8xbf16>
    %17 = vector.shape_cast %16 : vector<1x16x8xbf16> to vector<16x8xbf16>
    %18 = vector.shape_cast %15 : vector<16x8xbf16> to vector<1x16x8xbf16>
    tpu.vector_store %arg18[%c1, %c0_11, %c0_12], %18 {strides = array<i32>} : memref<8x16x8xbf16, #tpu.memory_space<vmem>>, vector<1x16x8xbf16>,
    %19 = vector.extract_strided_slice %5 {offsets = [0, 16], sizes = [16, 8], strides = [1, 1]} : vector<16x64xbf16> to vector<16x8xbf16>
    %c2 = arith.constant 2 : index
    %c0_13 = arith.constant 0 : index
    %c0_14 = arith.constant 0 : index
    %20 = vector.load %arg18[%c2, %c0_13, %c0_14] : memref<8x16x8xbf16, #tpu.memory_space<vmem>>, vector<1x16x8xbf16>
    %21 = vector.shape_cast %20 : vector<1x16x8xbf16> to vector<16x8xbf16>
    %22 = vector.shape_cast %19 : vector<16x8xbf16> to vector<1x16x8xbf16>
    tpu.vector_store %arg18[%c2, %c0_13, %c0_14], %22 {strides = array<i32>} : memref<8x16x8xbf16, #tpu.memory_space<vmem>>, vector<1x16x8xbf16>,
    %23 = vector.extract_strided_slice %5 {offsets = [0, 24], sizes = [16, 8], strides = [1, 1]} : vector<16x64xbf16> to vector<16x8xbf16>
    %c3 = arith.constant 3 : index
    %c0_15 = arith.constant 0 : index
    %c0_16 = arith.constant 0 : index
    %24 = vector.load %arg18[%c3, %c0_15, %c0_16] : memref<8x16x8xbf16, #tpu.memory_space<vmem>>, vector<1x16x8xbf16>
    %25 = vector.shape_cast %24 : vector<1x16x8xbf16> to vector<16x8xbf16>
    %26 = vector.shape_cast %23 : vector<16x8xbf16> to vector<1x16x8xbf16>
    tpu.vector_store %arg18[%c3, %c0_15, %c0_16], %26 {strides = array<i32>} : memref<8x16x8xbf16, #tpu.memory_space<vmem>>, vector<1x16x8xbf16>,
    %27 = vector.extract_strided_slice %5 {offsets = [0, 32], sizes = [16, 8], strides = [1, 1]} : vector<16x64xbf16> to vector<16x8xbf16>
    %c4 = arith.constant 4 : index
    %c0_17 = arith.constant 0 : index
    %c0_18 = arith.constant 0 : index
    %28 = vector.load %arg18[%c4, %c0_17, %c0_18] : memref<8x16x8xbf16, #tpu.memory_space<vmem>>, vector<1x16x8xbf16>
    %29 = vector.shape_cast %28 : vector<1x16x8xbf16> to vector<16x8xbf16>
    %30 = vector.shape_cast %27 : vector<16x8xbf16> to vector<1x16x8xbf16>
    tpu.vector_store %arg18[%c4, %c0_17, %c0_18], %30 {strides = array<i32>} : memref<8x16x8xbf16, #tpu.memory_space<vmem>>, vector<1x16x8xbf16>,
    %31 = vector.extract_strided_slice %5 {offsets = [0, 40], sizes = [16, 8], strides = [1, 1]} : vector<16x64xbf16> to vector<16x8xbf16>
    %c5 = arith.constant 5 : index
    %c0_19 = arith.constant 0 : index
    %c0_20 = arith.constant 0 : index
    %32 = vector.load %arg18[%c5, %c0_19, %c0_20] : memref<8x16x8xbf16, #tpu.memory_space<vmem>>, vector<1x16x8xbf16>
    %33 = vector.shape_cast %32 : vector<1x16x8xbf16> to vector<16x8xbf16>
    %34 = vector.shape_cast %31 : vector<16x8xbf16> to vector<1x16x8xbf16>
    tpu.vector_store %arg18[%c5, %c0_19, %c0_20], %34 {strides = array<i32>} : memref<8x16x8xbf16, #tpu.memory_space<vmem>>, vector<1x16x8xbf16>,
    %35 = vector.extract_strided_slice %5 {offsets = [0, 48], sizes = [16, 8], strides = [1, 1]} : vector<16x64xbf16> to vector<16x8xbf16>
    %c6 = arith.constant 6 : index
    %c0_21 = arith.constant 0 : index
    %c0_22 = arith.constant 0 : index
    %36 = vector.load %arg18[%c6, %c0_21, %c0_22] : memref<8x16x8xbf16, #tpu.memory_space<vmem>>, vector<1x16x8xbf16>
    %37 = vector.shape_cast %36 : vector<1x16x8xbf16> to vector<16x8xbf16>
    %38 = vector.shape_cast %35 : vector<16x8xbf16> to vector<1x16x8xbf16>
    tpu.vector_store %arg18[%c6, %c0_21, %c0_22], %38 {strides = array<i32>} : memref<8x16x8xbf16, #tpu.memory_space<vmem>>, vector<1x16x8xbf16>,
    %39 = vector.extract_strided_slice %5 {offsets = [0, 56], sizes = [16, 8], strides = [1, 1]} : vector<16x64xbf16> to vector<16x8xbf16>
    %c7 = arith.constant 7 : index
    %c0_23 = arith.constant 0 : index
    %c0_24 = arith.constant 0 : index
    %40 = vector.load %arg18[%c7, %c0_23, %c0_24] : memref<8x16x8xbf16, #tpu.memory_space<vmem>>, vector<1x16x8xbf16>
    %41 = vector.shape_cast %40 : vector<1x16x8xbf16> to vector<16x8xbf16>
    %42 = vector.shape_cast %39 : vector<16x8xbf16> to vector<1x16x8xbf16>
    tpu.vector_store %arg18[%c7, %c0_23, %c0_24], %42 {strides = array<i32>} : memref<8x16x8xbf16, #tpu.memory_space<vmem>>, vector<1x16x8xbf16>,
    %43 = tpu.iota {dimensions = array<i32: 1>} : vector<1x8xi32>
    %44 = tpu.iota {dimensions = array<i32: 0>} : vector<8x1xi32>
    %c0_i32 = arith.constant 0 : i32
    %c8_i32 = arith.constant 8 : i32
    %45 = arith.addi %c0_i32, %c8_i32 : i32
    %c1_i32 = arith.constant 1 : i32
    scf.for %arg24 = %c0_i32 to %45 step %c1_i32  : i32 {
      %209 = vector.broadcast %arg24 : i32 to vector<1x8xi32>
      %210 = arith.cmpi eq, %43, %209 : vector<1x8xi32>
      %cst_141 = arith.constant 0.000000e+00 : f32
      %211 = vector.shape_cast %210 : vector<1x8xi1> to vector<1x8xi1>
      %212 = vector.broadcast %211 : vector<1x8xi1> to vector<16x8xi1>
      %213 = vector.broadcast %cst_141 : f32 to vector<16x8xf32>
      %214 = arith.select %212, %8, %213 : vector<16x8xi1>, vector<16x8xf32>
      %cst_142 = arith.constant dense<0.000000e+00> : vector<16xf32>
      %215 = vector.multi_reduction <add>, %214, %cst_142 [1] : vector<16x8xf32> to vector<16xf32>
      %216 = vector.shape_cast %215 : vector<16xf32> to vector<16x1xf32>
      %217 = vector.broadcast %arg24 : i32 to vector<8x1xi32>
      %218 = arith.cmpi eq, %44, %217 : vector<8x1xi32>
      %cst_143 = arith.constant 0.000000e+00 : f32
      %219 = vector.shape_cast %218 : vector<8x1xi1> to vector<8x1xi1>
      %220 = vector.broadcast %219 : vector<8x1xi1> to vector<8x16xi1>
      %221 = vector.broadcast %cst_143 : f32 to vector<8x16xf32>
      %222 = arith.select %220, %10, %221 : vector<8x16xi1>, vector<8x16xf32>
      %cst_144 = arith.constant dense<0.000000e+00> : vector<16xf32>
      %223 = vector.multi_reduction <add>, %222, %cst_144 [0] : vector<8x16xf32> to vector<16xf32>
      %224 = vector.shape_cast %223 : vector<16xf32> to vector<1x16xf32>
      %225 = arith.index_cast %arg24 : i32 to index
      %c0_145 = arith.constant 0 : index
      %c0_146 = arith.constant 0 : index
      %226 = vector.load %arg18[%225, %c0_145, %c0_146] : memref<8x16x8xbf16, #tpu.memory_space<vmem>>, vector<1x16x8xbf16>
      %227 = vector.shape_cast %226 : vector<1x16x8xbf16> to vector<16x8xbf16>
      %228 = vector.broadcast %216 : vector<16x1xf32> to vector<16x16xf32>
      %229 = vector.broadcast %224 : vector<1x16xf32> to vector<16x16xf32>
      %230 = arith.addf %228, %229 : vector<16x16xf32>
      %cst_147 = arith.constant 2.000000e-01 : f32
      %231 = vector.broadcast %cst_147 : f32 to vector<16x16xf32>
      %232 = arith.mulf %231, %230 : vector<16x16xf32>
      %233 = arith.maximumf %230, %232 : vector<16x16xf32>
      %234 = arith.addf %233, %1 : vector<16x16xf32>
      %cst_148 = arith.constant dense<0xFF800000> : vector<16xf32>
      %235 = vector.multi_reduction <maximumf>, %234, %cst_148 [1] : vector<16x16xf32> to vector<16xf32>
      %236 = vector.shape_cast %235 : vector<16xf32> to vector<16x1xf32>
      %237 = vector.broadcast %236 : vector<16x1xf32> to vector<16x16xf32>
      %238 = arith.subf %234, %237 : vector<16x16xf32>
      %239 = math.exp %238 : vector<16x16xf32>
      %cst_149 = arith.constant dense<0.000000e+00> : vector<16xf32>
      %240 = vector.multi_reduction <add>, %239, %cst_149 [1] : vector<16x16xf32> to vector<16xf32>
      %241 = vector.shape_cast %240 : vector<16xf32> to vector<16x1xf32>
      %242 = tpu.reciprocal %241 {approx = true} : vector<16x1xf32> -> vector<16x1xf32>
      %243 = arith.truncf %239 : vector<16x16xf32> to vector<16x16xbf16>
      %cst_150 = arith.constant dense<0.000000e+00> : vector<16x8xf32>
      %244 = tpu.matmul %243, %227, %cst_150 {dimension_numbers = #tpu.dot_dimension_numbers<[1], [0], [0], [1], [0, 0, 1, 1], [], []>} : vector<16x16xbf16>, vector<16x8xbf16>, vector<16x8xf32> -> vector<16x8xf32>
      %245 = vector.broadcast %242 : vector<16x1xf32> to vector<16x8xf32>
      %246 = arith.mulf %245, %244 : vector<16x8xf32>
      %247 = arith.index_cast %arg24 : i32 to index
      %c0_151 = arith.constant 0 : index
      %c0_152 = arith.constant 0 : index
      %248 = vector.load %arg19[%247, %c0_151, %c0_152] : memref<8x16x8xf32, #tpu.memory_space<vmem>>, vector<1x16x8xf32>
      %249 = vector.shape_cast %248 : vector<1x16x8xf32> to vector<16x8xf32>
      %250 = vector.shape_cast %246 : vector<16x8xf32> to vector<1x16x8xf32>
      tpu.vector_store %arg19[%247, %c0_151, %c0_152], %250 {strides = array<i32>} : memref<8x16x8xf32, #tpu.memory_space<vmem>>, vector<1x16x8xf32>,
    }
    %c8_i32_25 = arith.constant 8 : i32
    %c0_26 = arith.constant 0 : index
    %c0_27 = arith.constant 0 : index
    %c0_28 = arith.constant 0 : index
    %46 = vector.load %arg19[%c0_26, %c0_27, %c0_28] : memref<8x16x8xf32, #tpu.memory_space<vmem>>, vector<1x16x8xf32>
    %47 = vector.shape_cast %46 : vector<1x16x8xf32> to vector<16x8xf32>
    %c1_29 = arith.constant 1 : index
    %c0_30 = arith.constant 0 : index
    %c0_31 = arith.constant 0 : index
    %48 = vector.load %arg19[%c1_29, %c0_30, %c0_31] : memref<8x16x8xf32, #tpu.memory_space<vmem>>, vector<1x16x8xf32>
    %49 = vector.shape_cast %48 : vector<1x16x8xf32> to vector<16x8xf32>
    %c2_32 = arith.constant 2 : index
    %c0_33 = arith.constant 0 : index
    %c0_34 = arith.constant 0 : index
    %50 = vector.load %arg19[%c2_32, %c0_33, %c0_34] : memref<8x16x8xf32, #tpu.memory_space<vmem>>, vector<1x16x8xf32>
    %51 = vector.shape_cast %50 : vector<1x16x8xf32> to vector<16x8xf32>
    %c3_35 = arith.constant 3 : index
    %c0_36 = arith.constant 0 : index
    %c0_37 = arith.constant 0 : index
    %52 = vector.load %arg19[%c3_35, %c0_36, %c0_37] : memref<8x16x8xf32, #tpu.memory_space<vmem>>, vector<1x16x8xf32>
    %53 = vector.shape_cast %52 : vector<1x16x8xf32> to vector<16x8xf32>
    %c4_38 = arith.constant 4 : index
    %c0_39 = arith.constant 0 : index
    %c0_40 = arith.constant 0 : index
    %54 = vector.load %arg19[%c4_38, %c0_39, %c0_40] : memref<8x16x8xf32, #tpu.memory_space<vmem>>, vector<1x16x8xf32>
    %55 = vector.shape_cast %54 : vector<1x16x8xf32> to vector<16x8xf32>
    %c5_41 = arith.constant 5 : index
    %c0_42 = arith.constant 0 : index
    %c0_43 = arith.constant 0 : index
    %56 = vector.load %arg19[%c5_41, %c0_42, %c0_43] : memref<8x16x8xf32, #tpu.memory_space<vmem>>, vector<1x16x8xf32>
    %57 = vector.shape_cast %56 : vector<1x16x8xf32> to vector<16x8xf32>
    %c6_44 = arith.constant 6 : index
    %c0_45 = arith.constant 0 : index
    %c0_46 = arith.constant 0 : index
    %58 = vector.load %arg19[%c6_44, %c0_45, %c0_46] : memref<8x16x8xf32, #tpu.memory_space<vmem>>, vector<1x16x8xf32>
    %59 = vector.shape_cast %58 : vector<1x16x8xf32> to vector<16x8xf32>
    %c7_47 = arith.constant 7 : index
    %c0_48 = arith.constant 0 : index
    %c0_49 = arith.constant 0 : index
    %60 = vector.load %arg19[%c7_47, %c0_48, %c0_49] : memref<8x16x8xf32, #tpu.memory_space<vmem>>, vector<1x16x8xf32>
    %61 = vector.shape_cast %60 : vector<1x16x8xf32> to vector<16x8xf32>
    %62 = tpu.concatenate %47, %49, %51, %53, %55, %57, %59, %61 in 1 : vector<16x8xf32>, vector<16x8xf32>, vector<16x8xf32>, vector<16x8xf32>, vector<16x8xf32>, vector<16x8xf32>, vector<16x8xf32>, vector<16x8xf32> -> vector<16x64xf32>
    %c0_50 = arith.constant 0 : index
    %c0_51 = arith.constant 0 : index
    %63 = vector.load %arg4[%c0_50, %c0_51] : memref<1x64xf32, #tpu.memory_space<vmem>>, vector<1x64xf32>
    %64 = vector.broadcast %63 : vector<1x64xf32> to vector<16x64xf32>
    %65 = arith.mulf %62, %64 : vector<16x64xf32>
    %c0_52 = arith.constant 0 : index
    %c0_53 = arith.constant 0 : index
    %66 = vector.load %arg5[%c0_52, %c0_53] : memref<1x64xf32, #tpu.memory_space<vmem>>, vector<1x64xf32>
    %67 = vector.broadcast %66 : vector<1x64xf32> to vector<16x64xf32>
    %68 = arith.addf %65, %67 : vector<16x64xf32>
    %cst_54 = arith.constant 0.000000e+00 : f32
    %69 = vector.broadcast %cst_54 : f32 to vector<16x64xf32>
    %70 = arith.cmpf ogt, %68, %69 : vector<16x64xf32>
    %cst_55 = arith.constant 0.000000e+00 : f32
    %71 = vector.broadcast %cst_55 : f32 to vector<16x64xf32>
    %72 = arith.minimumf %68, %71 : vector<16x64xf32>
    %73 = math.exp %72 : vector<16x64xf32>
    %cst_56 = arith.constant 1.000000e+00 : f32
    %74 = vector.broadcast %cst_56 : f32 to vector<16x64xf32>
    %75 = arith.subf %73, %74 : vector<16x64xf32>
    %76 = arith.select %70, %68, %75 : vector<16x64xi1>, vector<16x64xf32>
    %77 = arith.truncf %76 : vector<16x64xf32> to vector<16x64xbf16>
    %c0_57 = arith.constant 0 : index
    %c0_58 = arith.constant 0 : index
    %78 = vector.load %arg6[%c0_57, %c0_58] : memref<64x32xbf16, #tpu.memory_space<vmem>>, vector<64x32xbf16>
    %cst_59 = arith.constant dense<0.000000e+00> : vector<16x32xf32>
    %79 = tpu.matmul %77, %78, %cst_59 {dimension_numbers = #tpu.dot_dimension_numbers<[1], [0], [0], [1], [0, 0, 1, 1], [], []>} : vector<16x64xbf16>, vector<64x32xbf16>, vector<16x32xf32> -> vector<16x32xf32>
    %80 = arith.truncf %79 : vector<16x32xf32> to vector<16x32xbf16>
    %c0_60 = arith.constant 0 : index
    %c0_61 = arith.constant 0 : index
    %81 = vector.load %arg7[%c0_60, %c0_61] : memref<32x8xbf16, #tpu.memory_space<vmem>>, vector<32x8xbf16>
    %cst_62 = arith.constant dense<0.000000e+00> : vector<16x8xf32>
    %82 = tpu.matmul %80, %81, %cst_62 {dimension_numbers = #tpu.dot_dimension_numbers<[1], [0], [0], [1], [0, 0, 1, 1], [], []>} : vector<16x32xbf16>, vector<32x8xbf16>, vector<16x8xf32> -> vector<16x8xf32>
    %83 = vector.extract_strided_slice %82 {offsets = [0, 4], sizes = [16, 4], strides = [1, 1]} : vector<16x8xf32> to vector<16x4xf32>
    %84 = vector.extract_strided_slice %82 {offsets = [0, 0], sizes = [16, 4], strides = [1, 1]} : vector<16x8xf32> to vector<16x4xf32>
    %85 = tpu.transpose %84, [1, 0] : vector<16x4xf32> -> vector<4x16xf32>
    %86 = vector.extract_strided_slice %80 {offsets = [0, 0], sizes = [16, 8], strides = [1, 1]} : vector<16x32xbf16> to vector<16x8xbf16>
    %c0_63 = arith.constant 0 : index
    %c0_64 = arith.constant 0 : index
    %c0_65 = arith.constant 0 : index
    %87 = vector.load %arg20[%c0_63, %c0_64, %c0_65] : memref<4x16x8xbf16, #tpu.memory_space<vmem>>, vector<1x16x8xbf16>
    %88 = vector.shape_cast %87 : vector<1x16x8xbf16> to vector<16x8xbf16>
    %89 = vector.shape_cast %86 : vector<16x8xbf16> to vector<1x16x8xbf16>
    tpu.vector_store %arg20[%c0_63, %c0_64, %c0_65], %89 {strides = array<i32>} : memref<4x16x8xbf16, #tpu.memory_space<vmem>>, vector<1x16x8xbf16>,
    %90 = vector.extract_strided_slice %80 {offsets = [0, 8], sizes = [16, 8], strides = [1, 1]} : vector<16x32xbf16> to vector<16x8xbf16>
    %c1_66 = arith.constant 1 : index
    %c0_67 = arith.constant 0 : index
    %c0_68 = arith.constant 0 : index
    %91 = vector.load %arg20[%c1_66, %c0_67, %c0_68] : memref<4x16x8xbf16, #tpu.memory_space<vmem>>, vector<1x16x8xbf16>
    %92 = vector.shape_cast %91 : vector<1x16x8xbf16> to vector<16x8xbf16>
    %93 = vector.shape_cast %90 : vector<16x8xbf16> to vector<1x16x8xbf16>
    tpu.vector_store %arg20[%c1_66, %c0_67, %c0_68], %93 {strides = array<i32>} : memref<4x16x8xbf16, #tpu.memory_space<vmem>>, vector<1x16x8xbf16>,
    %94 = vector.extract_strided_slice %80 {offsets = [0, 16], sizes = [16, 8], strides = [1, 1]} : vector<16x32xbf16> to vector<16x8xbf16>
    %c2_69 = arith.constant 2 : index
    %c0_70 = arith.constant 0 : index
    %c0_71 = arith.constant 0 : index
    %95 = vector.load %arg20[%c2_69, %c0_70, %c0_71] : memref<4x16x8xbf16, #tpu.memory_space<vmem>>, vector<1x16x8xbf16>
    %96 = vector.shape_cast %95 : vector<1x16x8xbf16> to vector<16x8xbf16>
    %97 = vector.shape_cast %94 : vector<16x8xbf16> to vector<1x16x8xbf16>
    tpu.vector_store %arg20[%c2_69, %c0_70, %c0_71], %97 {strides = array<i32>} : memref<4x16x8xbf16, #tpu.memory_space<vmem>>, vector<1x16x8xbf16>,
    %98 = vector.extract_strided_slice %80 {offsets = [0, 24], sizes = [16, 8], strides = [1, 1]} : vector<16x32xbf16> to vector<16x8xbf16>
    %c3_72 = arith.constant 3 : index
    %c0_73 = arith.constant 0 : index
    %c0_74 = arith.constant 0 : index
    %99 = vector.load %arg20[%c3_72, %c0_73, %c0_74] : memref<4x16x8xbf16, #tpu.memory_space<vmem>>, vector<1x16x8xbf16>
    %100 = vector.shape_cast %99 : vector<1x16x8xbf16> to vector<16x8xbf16>
    %101 = vector.shape_cast %98 : vector<16x8xbf16> to vector<1x16x8xbf16>
    tpu.vector_store %arg20[%c3_72, %c0_73, %c0_74], %101 {strides = array<i32>} : memref<4x16x8xbf16, #tpu.memory_space<vmem>>, vector<1x16x8xbf16>,
    %102 = tpu.iota {dimensions = array<i32: 1>} : vector<1x4xi32>
    %103 = tpu.iota {dimensions = array<i32: 0>} : vector<4x1xi32>
    %c0_i32_75 = arith.constant 0 : i32
    %c4_i32 = arith.constant 4 : i32
    %104 = arith.addi %c0_i32_75, %c4_i32 : i32
    %c1_i32_76 = arith.constant 1 : i32
    scf.for %arg24 = %c0_i32_75 to %104 step %c1_i32_76  : i32 {
      %209 = vector.broadcast %arg24 : i32 to vector<1x4xi32>
      %210 = arith.cmpi eq, %102, %209 : vector<1x4xi32>
      %cst_141 = arith.constant 0.000000e+00 : f32
      %211 = vector.shape_cast %210 : vector<1x4xi1> to vector<1x4xi1>
      %212 = vector.broadcast %211 : vector<1x4xi1> to vector<16x4xi1>
      %213 = vector.broadcast %cst_141 : f32 to vector<16x4xf32>
      %214 = arith.select %212, %83, %213 : vector<16x4xi1>, vector<16x4xf32>
      %cst_142 = arith.constant dense<0.000000e+00> : vector<16xf32>
      %215 = vector.multi_reduction <add>, %214, %cst_142 [1] : vector<16x4xf32> to vector<16xf32>
      %216 = vector.shape_cast %215 : vector<16xf32> to vector<16x1xf32>
      %217 = vector.broadcast %arg24 : i32 to vector<4x1xi32>
      %218 = arith.cmpi eq, %103, %217 : vector<4x1xi32>
      %cst_143 = arith.constant 0.000000e+00 : f32
      %219 = vector.shape_cast %218 : vector<4x1xi1> to vector<4x1xi1>
      %220 = vector.broadcast %219 : vector<4x1xi1> to vector<4x16xi1>
      %221 = vector.broadcast %cst_143 : f32 to vector<4x16xf32>
      %222 = arith.select %220, %85, %221 : vector<4x16xi1>, vector<4x16xf32>
      %cst_144 = arith.constant dense<0.000000e+00> : vector<16xf32>
      %223 = vector.multi_reduction <add>, %222, %cst_144 [0] : vector<4x16xf32> to vector<16xf32>
      %224 = vector.shape_cast %223 : vector<16xf32> to vector<1x16xf32>
      %225 = arith.index_cast %arg24 : i32 to index
      %c0_145 = arith.constant 0 : index
      %c0_146 = arith.constant 0 : index
      %226 = vector.load %arg20[%225, %c0_145, %c0_146] : memref<4x16x8xbf16, #tpu.memory_space<vmem>>, vector<1x16x8xbf16>
      %227 = vector.shape_cast %226 : vector<1x16x8xbf16> to vector<16x8xbf16>
      %228 = vector.broadcast %216 : vector<16x1xf32> to vector<16x16xf32>
      %229 = vector.broadcast %224 : vector<1x16xf32> to vector<16x16xf32>
      %230 = arith.addf %228, %229 : vector<16x16xf32>
      %cst_147 = arith.constant 2.000000e-01 : f32
      %231 = vector.broadcast %cst_147 : f32 to vector<16x16xf32>
      %232 = arith.mulf %231, %230 : vector<16x16xf32>
      %233 = arith.maximumf %230, %232 : vector<16x16xf32>
      %234 = arith.addf %233, %1 : vector<16x16xf32>
      %cst_148 = arith.constant dense<0xFF800000> : vector<16xf32>
      %235 = vector.multi_reduction <maximumf>, %234, %cst_148 [1] : vector<16x16xf32> to vector<16xf32>
      %236 = vector.shape_cast %235 : vector<16xf32> to vector<16x1xf32>
      %237 = vector.broadcast %236 : vector<16x1xf32> to vector<16x16xf32>
      %238 = arith.subf %234, %237 : vector<16x16xf32>
      %239 = math.exp %238 : vector<16x16xf32>
      %cst_149 = arith.constant dense<0.000000e+00> : vector<16xf32>
      %240 = vector.multi_reduction <add>, %239, %cst_149 [1] : vector<16x16xf32> to vector<16xf32>
      %241 = vector.shape_cast %240 : vector<16xf32> to vector<16x1xf32>
      %242 = tpu.reciprocal %241 {approx = true} : vector<16x1xf32> -> vector<16x1xf32>
      %243 = arith.truncf %239 : vector<16x16xf32> to vector<16x16xbf16>
      %cst_150 = arith.constant dense<0.000000e+00> : vector<16x8xf32>
      %244 = tpu.matmul %243, %227, %cst_150 {dimension_numbers = #tpu.dot_dimension_numbers<[1], [0], [0], [1], [0, 0, 1, 1], [], []>} : vector<16x16xbf16>, vector<16x8xbf16>, vector<16x8xf32> -> vector<16x8xf32>
      %245 = vector.broadcast %242 : vector<16x1xf32> to vector<16x8xf32>
      %246 = arith.mulf %245, %244 : vector<16x8xf32>
      %247 = arith.index_cast %arg24 : i32 to index
      %c0_151 = arith.constant 0 : index
      %c0_152 = arith.constant 0 : index
      %248 = vector.load %arg21[%247, %c0_151, %c0_152] : memref<4x16x8xf32, #tpu.memory_space<vmem>>, vector<1x16x8xf32>
      %249 = vector.shape_cast %248 : vector<1x16x8xf32> to vector<16x8xf32>
      %250 = vector.shape_cast %246 : vector<16x8xf32> to vector<1x16x8xf32>
      tpu.vector_store %arg21[%247, %c0_151, %c0_152], %250 {strides = array<i32>} : memref<4x16x8xf32, #tpu.memory_space<vmem>>, vector<1x16x8xf32>,
    }
    %c4_i32_77 = arith.constant 4 : i32
    %c0_78 = arith.constant 0 : index
    %c0_79 = arith.constant 0 : index
    %c0_80 = arith.constant 0 : index
    %105 = vector.load %arg21[%c0_78, %c0_79, %c0_80] : memref<4x16x8xf32, #tpu.memory_space<vmem>>, vector<1x16x8xf32>
    %106 = vector.shape_cast %105 : vector<1x16x8xf32> to vector<16x8xf32>
    %c1_81 = arith.constant 1 : index
    %c0_82 = arith.constant 0 : index
    %c0_83 = arith.constant 0 : index
    %107 = vector.load %arg21[%c1_81, %c0_82, %c0_83] : memref<4x16x8xf32, #tpu.memory_space<vmem>>, vector<1x16x8xf32>
    %108 = vector.shape_cast %107 : vector<1x16x8xf32> to vector<16x8xf32>
    %c2_84 = arith.constant 2 : index
    %c0_85 = arith.constant 0 : index
    %c0_86 = arith.constant 0 : index
    %109 = vector.load %arg21[%c2_84, %c0_85, %c0_86] : memref<4x16x8xf32, #tpu.memory_space<vmem>>, vector<1x16x8xf32>
    %110 = vector.shape_cast %109 : vector<1x16x8xf32> to vector<16x8xf32>
    %c3_87 = arith.constant 3 : index
    %c0_88 = arith.constant 0 : index
    %c0_89 = arith.constant 0 : index
    %111 = vector.load %arg21[%c3_87, %c0_88, %c0_89] : memref<4x16x8xf32, #tpu.memory_space<vmem>>, vector<1x16x8xf32>
    %112 = vector.shape_cast %111 : vector<1x16x8xf32> to vector<16x8xf32>
    %113 = tpu.concatenate %106, %108, %110, %112 in 1 : vector<16x8xf32>, vector<16x8xf32>, vector<16x8xf32>, vector<16x8xf32> -> vector<16x32xf32>
    %c0_90 = arith.constant 0 : index
    %c0_91 = arith.constant 0 : index
    %114 = vector.load %arg8[%c0_90, %c0_91] : memref<1x32xf32, #tpu.memory_space<vmem>>, vector<1x32xf32>
    %115 = vector.broadcast %114 : vector<1x32xf32> to vector<16x32xf32>
    %116 = arith.mulf %113, %115 : vector<16x32xf32>
    %c0_92 = arith.constant 0 : index
    %c0_93 = arith.constant 0 : index
    %117 = vector.load %arg9[%c0_92, %c0_93] : memref<1x32xf32, #tpu.memory_space<vmem>>, vector<1x32xf32>
    %118 = vector.broadcast %117 : vector<1x32xf32> to vector<16x32xf32>
    %119 = arith.addf %116, %118 : vector<16x32xf32>
    %cst_94 = arith.constant 0.000000e+00 : f32
    %120 = vector.broadcast %cst_94 : f32 to vector<16x32xf32>
    %121 = arith.cmpf ogt, %119, %120 : vector<16x32xf32>
    %cst_95 = arith.constant 0.000000e+00 : f32
    %122 = vector.broadcast %cst_95 : f32 to vector<16x32xf32>
    %123 = arith.minimumf %119, %122 : vector<16x32xf32>
    %124 = math.exp %123 : vector<16x32xf32>
    %cst_96 = arith.constant 1.000000e+00 : f32
    %125 = vector.broadcast %cst_96 : f32 to vector<16x32xf32>
    %126 = arith.subf %124, %125 : vector<16x32xf32>
    %127 = arith.select %121, %119, %126 : vector<16x32xi1>, vector<16x32xf32>
    %128 = arith.truncf %127 : vector<16x32xf32> to vector<16x32xbf16>
    %c0_97 = arith.constant 0 : index
    %c0_98 = arith.constant 0 : index
    %129 = vector.load %arg10[%c0_97, %c0_98] : memref<32x16xbf16, #tpu.memory_space<vmem>>, vector<32x16xbf16>
    %cst_99 = arith.constant dense<0.000000e+00> : vector<16x16xf32>
    %130 = tpu.matmul %128, %129, %cst_99 {dimension_numbers = #tpu.dot_dimension_numbers<[1], [0], [0], [1], [0, 0, 1, 1], [], []>} : vector<16x32xbf16>, vector<32x16xbf16>, vector<16x16xf32> -> vector<16x16xf32>
    %131 = arith.truncf %130 : vector<16x16xf32> to vector<16x16xbf16>
    %c0_100 = arith.constant 0 : index
    %c0_101 = arith.constant 0 : index
    %132 = vector.load %arg11[%c0_100, %c0_101] : memref<16x4xbf16, #tpu.memory_space<vmem>>, vector<16x4xbf16>
    %cst_102 = arith.constant dense<0.000000e+00> : vector<16x4xf32>
    %133 = tpu.matmul %131, %132, %cst_102 {dimension_numbers = #tpu.dot_dimension_numbers<[1], [0], [0], [1], [0, 0, 1, 1], [], []>} : vector<16x16xbf16>, vector<16x4xbf16>, vector<16x4xf32> -> vector<16x4xf32>
    %134 = vector.extract_strided_slice %133 {offsets = [0, 2], sizes = [16, 2], strides = [1, 1]} : vector<16x4xf32> to vector<16x2xf32>
    %135 = vector.extract_strided_slice %133 {offsets = [0, 0], sizes = [16, 2], strides = [1, 1]} : vector<16x4xf32> to vector<16x2xf32>
    %136 = tpu.transpose %135, [1, 0] : vector<16x2xf32> -> vector<2x16xf32>
    %137 = vector.extract_strided_slice %131 {offsets = [0, 0], sizes = [16, 8], strides = [1, 1]} : vector<16x16xbf16> to vector<16x8xbf16>
    %c0_103 = arith.constant 0 : index
    %c0_104 = arith.constant 0 : index
    %c0_105 = arith.constant 0 : index
    %138 = vector.load %arg22[%c0_103, %c0_104, %c0_105] : memref<2x16x8xbf16, #tpu.memory_space<vmem>>, vector<1x16x8xbf16>
    %139 = vector.shape_cast %138 : vector<1x16x8xbf16> to vector<16x8xbf16>
    %140 = vector.shape_cast %137 : vector<16x8xbf16> to vector<1x16x8xbf16>
    tpu.vector_store %arg22[%c0_103, %c0_104, %c0_105], %140 {strides = array<i32>} : memref<2x16x8xbf16, #tpu.memory_space<vmem>>, vector<1x16x8xbf16>,
    %141 = vector.extract_strided_slice %131 {offsets = [0, 8], sizes = [16, 8], strides = [1, 1]} : vector<16x16xbf16> to vector<16x8xbf16>
    %c1_106 = arith.constant 1 : index
    %c0_107 = arith.constant 0 : index
    %c0_108 = arith.constant 0 : index
    %142 = vector.load %arg22[%c1_106, %c0_107, %c0_108] : memref<2x16x8xbf16, #tpu.memory_space<vmem>>, vector<1x16x8xbf16>
    %143 = vector.shape_cast %142 : vector<1x16x8xbf16> to vector<16x8xbf16>
    %144 = vector.shape_cast %141 : vector<16x8xbf16> to vector<1x16x8xbf16>
    tpu.vector_store %arg22[%c1_106, %c0_107, %c0_108], %144 {strides = array<i32>} : memref<2x16x8xbf16, #tpu.memory_space<vmem>>, vector<1x16x8xbf16>,
    %145 = tpu.iota {dimensions = array<i32: 1>} : vector<1x2xi32>
    %146 = tpu.iota {dimensions = array<i32: 0>} : vector<2x1xi32>
    %c0_i32_109 = arith.constant 0 : i32
    %c2_i32 = arith.constant 2 : i32
    %147 = arith.addi %c0_i32_109, %c2_i32 : i32
    %c1_i32_110 = arith.constant 1 : i32
    scf.for %arg24 = %c0_i32_109 to %147 step %c1_i32_110  : i32 {
      %209 = vector.broadcast %arg24 : i32 to vector<1x2xi32>
      %210 = arith.cmpi eq, %145, %209 : vector<1x2xi32>
      %cst_141 = arith.constant 0.000000e+00 : f32
      %211 = vector.shape_cast %210 : vector<1x2xi1> to vector<1x2xi1>
      %212 = vector.broadcast %211 : vector<1x2xi1> to vector<16x2xi1>
      %213 = vector.broadcast %cst_141 : f32 to vector<16x2xf32>
      %214 = arith.select %212, %134, %213 : vector<16x2xi1>, vector<16x2xf32>
      %cst_142 = arith.constant dense<0.000000e+00> : vector<16xf32>
      %215 = vector.multi_reduction <add>, %214, %cst_142 [1] : vector<16x2xf32> to vector<16xf32>
      %216 = vector.shape_cast %215 : vector<16xf32> to vector<16x1xf32>
      %217 = vector.broadcast %arg24 : i32 to vector<2x1xi32>
      %218 = arith.cmpi eq, %146, %217 : vector<2x1xi32>
      %cst_143 = arith.constant 0.000000e+00 : f32
      %219 = vector.shape_cast %218 : vector<2x1xi1> to vector<2x1xi1>
      %220 = vector.broadcast %219 : vector<2x1xi1> to vector<2x16xi1>
      %221 = vector.broadcast %cst_143 : f32 to vector<2x16xf32>
      %222 = arith.select %220, %136, %221 : vector<2x16xi1>, vector<2x16xf32>
      %cst_144 = arith.constant dense<0.000000e+00> : vector<16xf32>
      %223 = vector.multi_reduction <add>, %222, %cst_144 [0] : vector<2x16xf32> to vector<16xf32>
      %224 = vector.shape_cast %223 : vector<16xf32> to vector<1x16xf32>
      %225 = arith.index_cast %arg24 : i32 to index
      %c0_145 = arith.constant 0 : index
      %c0_146 = arith.constant 0 : index
      %226 = vector.load %arg22[%225, %c0_145, %c0_146] : memref<2x16x8xbf16, #tpu.memory_space<vmem>>, vector<1x16x8xbf16>
      %227 = vector.shape_cast %226 : vector<1x16x8xbf16> to vector<16x8xbf16>
      %228 = vector.broadcast %216 : vector<16x1xf32> to vector<16x16xf32>
      %229 = vector.broadcast %224 : vector<1x16xf32> to vector<16x16xf32>
      %230 = arith.addf %228, %229 : vector<16x16xf32>
      %cst_147 = arith.constant 2.000000e-01 : f32
      %231 = vector.broadcast %cst_147 : f32 to vector<16x16xf32>
      %232 = arith.mulf %231, %230 : vector<16x16xf32>
      %233 = arith.maximumf %230, %232 : vector<16x16xf32>
      %234 = arith.addf %233, %1 : vector<16x16xf32>
      %cst_148 = arith.constant dense<0xFF800000> : vector<16xf32>
      %235 = vector.multi_reduction <maximumf>, %234, %cst_148 [1] : vector<16x16xf32> to vector<16xf32>
      %236 = vector.shape_cast %235 : vector<16xf32> to vector<16x1xf32>
      %237 = vector.broadcast %236 : vector<16x1xf32> to vector<16x16xf32>
      %238 = arith.subf %234, %237 : vector<16x16xf32>
      %239 = math.exp %238 : vector<16x16xf32>
      %cst_149 = arith.constant dense<0.000000e+00> : vector<16xf32>
      %240 = vector.multi_reduction <add>, %239, %cst_149 [1] : vector<16x16xf32> to vector<16xf32>
      %241 = vector.shape_cast %240 : vector<16xf32> to vector<16x1xf32>
      %242 = tpu.reciprocal %241 {approx = true} : vector<16x1xf32> -> vector<16x1xf32>
      %243 = arith.truncf %239 : vector<16x16xf32> to vector<16x16xbf16>
      %cst_150 = arith.constant dense<0.000000e+00> : vector<16x8xf32>
      %244 = tpu.matmul %243, %227, %cst_150 {dimension_numbers = #tpu.dot_dimension_numbers<[1], [0], [0], [1], [0, 0, 1, 1], [], []>} : vector<16x16xbf16>, vector<16x8xbf16>, vector<16x8xf32> -> vector<16x8xf32>
      %245 = vector.broadcast %242 : vector<16x1xf32> to vector<16x8xf32>
      %246 = arith.mulf %245, %244 : vector<16x8xf32>
      %247 = arith.index_cast %arg24 : i32 to index
      %c0_151 = arith.constant 0 : index
      %c0_152 = arith.constant 0 : index
      %248 = vector.load %arg23[%247, %c0_151, %c0_152] : memref<2x16x8xf32, #tpu.memory_space<vmem>>, vector<1x16x8xf32>
      %249 = vector.shape_cast %248 : vector<1x16x8xf32> to vector<16x8xf32>
      %250 = vector.shape_cast %246 : vector<16x8xf32> to vector<1x16x8xf32>
      tpu.vector_store %arg23[%247, %c0_151, %c0_152], %250 {strides = array<i32>} : memref<2x16x8xf32, #tpu.memory_space<vmem>>, vector<1x16x8xf32>,
    }
    %c2_i32_111 = arith.constant 2 : i32
    %c0_112 = arith.constant 0 : index
    %c0_113 = arith.constant 0 : index
    %c0_114 = arith.constant 0 : index
    %148 = vector.load %arg23[%c0_112, %c0_113, %c0_114] : memref<2x16x8xf32, #tpu.memory_space<vmem>>, vector<1x16x8xf32>
    %149 = vector.shape_cast %148 : vector<1x16x8xf32> to vector<16x8xf32>
    %c1_115 = arith.constant 1 : index
    %c0_116 = arith.constant 0 : index
    %c0_117 = arith.constant 0 : index
    %150 = vector.load %arg23[%c1_115, %c0_116, %c0_117] : memref<2x16x8xf32, #tpu.memory_space<vmem>>, vector<1x16x8xf32>
    %151 = vector.shape_cast %150 : vector<1x16x8xf32> to vector<16x8xf32>
    %152 = tpu.concatenate %149, %151 in 1 : vector<16x8xf32>, vector<16x8xf32> -> vector<16x16xf32>
    %c0_118 = arith.constant 0 : index
    %c0_119 = arith.constant 0 : index
    %153 = vector.load %arg12[%c0_118, %c0_119] : memref<1x16xf32, #tpu.memory_space<vmem>>, vector<1x16xf32>
    %154 = vector.broadcast %153 : vector<1x16xf32> to vector<16x16xf32>
    %155 = arith.mulf %152, %154 : vector<16x16xf32>
    %c0_120 = arith.constant 0 : index
    %c0_121 = arith.constant 0 : index
    %156 = vector.load %arg13[%c0_120, %c0_121] : memref<1x16xf32, #tpu.memory_space<vmem>>, vector<1x16xf32>
    %157 = vector.broadcast %156 : vector<1x16xf32> to vector<16x16xf32>
    %158 = arith.addf %155, %157 : vector<16x16xf32>
    %cst_122 = arith.constant 0.000000e+00 : f32
    %159 = vector.broadcast %cst_122 : f32 to vector<16x16xf32>
    %160 = arith.cmpf ogt, %158, %159 : vector<16x16xf32>
    %cst_123 = arith.constant 0.000000e+00 : f32
    %161 = vector.broadcast %cst_123 : f32 to vector<16x16xf32>
    %162 = arith.minimumf %158, %161 : vector<16x16xf32>
    %163 = math.exp %162 : vector<16x16xf32>
    %cst_124 = arith.constant 1.000000e+00 : f32
    %164 = vector.broadcast %cst_124 : f32 to vector<16x16xf32>
    %165 = arith.subf %163, %164 : vector<16x16xf32>
    %166 = arith.select %160, %158, %165 : vector<16x16xi1>, vector<16x16xf32>
    %167 = arith.truncf %166 : vector<16x16xf32> to vector<16x16xbf16>
    %c0_125 = arith.constant 0 : index
    %c0_126 = arith.constant 0 : index
    %168 = vector.load %arg14[%c0_125, %c0_126] : memref<16x4xbf16, #tpu.memory_space<vmem>>, vector<16x4xbf16>
    %cst_127 = arith.constant dense<0.000000e+00> : vector<16x4xf32>
    %169 = tpu.matmul %167, %168, %cst_127 {dimension_numbers = #tpu.dot_dimension_numbers<[1], [0], [0], [1], [0, 0, 1, 1], [], []>} : vector<16x16xbf16>, vector<16x4xbf16>, vector<16x4xf32> -> vector<16x4xf32>
    %170 = arith.truncf %169 : vector<16x4xf32> to vector<16x4xbf16>
    %c0_128 = arith.constant 0 : index
    %c0_129 = arith.constant 0 : index
    %171 = vector.load %arg15[%c0_128, %c0_129] : memref<4x2xbf16, #tpu.memory_space<vmem>>, vector<4x2xbf16>
    %cst_130 = arith.constant dense<0.000000e+00> : vector<16x2xf32>
    %172 = tpu.matmul %170, %171, %cst_130 {dimension_numbers = #tpu.dot_dimension_numbers<[1], [0], [0], [1], [0, 0, 1, 1], [], []>} : vector<16x4xbf16>, vector<4x2xbf16>, vector<16x2xf32> -> vector<16x2xf32>
    %173 = vector.extract_strided_slice %172 {offsets = [0, 1], sizes = [16, 1], strides = [1, 1]} : vector<16x2xf32> to vector<16x1xf32>
    %174 = vector.extract_strided_slice %172 {offsets = [0, 0], sizes = [16, 1], strides = [1, 1]} : vector<16x2xf32> to vector<16x1xf32>
    %175 = tpu.transpose %174, [1, 0] : vector<16x1xf32> -> vector<1x16xf32>
    %176 = vector.broadcast %173 : vector<16x1xf32> to vector<16x16xf32>
    %177 = vector.broadcast %175 : vector<1x16xf32> to vector<16x16xf32>
    %178 = arith.addf %176, %177 : vector<16x16xf32>
    %cst_131 = arith.constant 2.000000e-01 : f32
    %179 = vector.broadcast %cst_131 : f32 to vector<16x16xf32>
    %180 = arith.mulf %179, %178 : vector<16x16xf32>
    %181 = arith.maximumf %178, %180 : vector<16x16xf32>
    %182 = arith.addf %181, %1 : vector<16x16xf32>
    %cst_132 = arith.constant dense<0xFF800000> : vector<16xf32>
    %183 = vector.multi_reduction <maximumf>, %182, %cst_132 [1] : vector<16x16xf32> to vector<16xf32>
    %184 = vector.shape_cast %183 : vector<16xf32> to vector<16x1xf32>
    %185 = vector.broadcast %184 : vector<16x1xf32> to vector<16x16xf32>
    %186 = arith.subf %182, %185 : vector<16x16xf32>
    %187 = math.exp %186 : vector<16x16xf32>
    %cst_133 = arith.constant dense<0.000000e+00> : vector<16xf32>
    %188 = vector.multi_reduction <add>, %187, %cst_133 [1] : vector<16x16xf32> to vector<16xf32>
    %189 = vector.shape_cast %188 : vector<16xf32> to vector<16x1xf32>
    %190 = tpu.reciprocal %189 {approx = true} : vector<16x1xf32> -> vector<16x1xf32>
    %191 = arith.truncf %187 : vector<16x16xf32> to vector<16x16xbf16>
    %cst_134 = arith.constant dense<0.000000e+00> : vector<16x4xf32>
    %192 = tpu.matmul %191, %170, %cst_134 {dimension_numbers = #tpu.dot_dimension_numbers<[1], [0], [0], [1], [0, 0, 1, 1], [], []>} : vector<16x16xbf16>, vector<16x4xbf16>, vector<16x4xf32> -> vector<16x4xf32>
    %193 = vector.broadcast %190 : vector<16x1xf32> to vector<16x4xf32>
    %194 = arith.mulf %193, %192 : vector<16x4xf32>
    %c0_135 = arith.constant 0 : index
    %c0_136 = arith.constant 0 : index
    %195 = vector.load %arg16[%c0_135, %c0_136] : memref<1x4xf32, #tpu.memory_space<vmem>>, vector<1x4xf32>
    %196 = vector.broadcast %195 : vector<1x4xf32> to vector<16x4xf32>
    %197 = arith.addf %194, %196 : vector<16x4xf32>
    %cst_137 = arith.constant dense<0xFF800000> : vector<16xf32>
    %198 = vector.multi_reduction <maximumf>, %197, %cst_137 [1] : vector<16x4xf32> to vector<16xf32>
    %199 = vector.shape_cast %198 : vector<16xf32> to vector<16x1xf32>
    %200 = vector.broadcast %199 : vector<16x1xf32> to vector<16x4xf32>
    %201 = arith.subf %197, %200 : vector<16x4xf32>
    %202 = math.exp %201 : vector<16x4xf32>
    %cst_138 = arith.constant dense<0.000000e+00> : vector<16xf32>
    %203 = vector.multi_reduction <add>, %202, %cst_138 [1] : vector<16x4xf32> to vector<16xf32>
    %204 = vector.shape_cast %203 : vector<16xf32> to vector<16x1xf32>
    %205 = math.log %204 : vector<16x1xf32>
    %206 = vector.broadcast %205 : vector<16x1xf32> to vector<16x4xf32>
    %207 = arith.subf %201, %206 : vector<16x4xf32>
    %c0_139 = arith.constant 0 : index
    %c0_140 = arith.constant 0 : index
    %208 = vector.load %arg17[%c0_139, %c0_140] : memref<16x4xf32, #tpu.memory_space<vmem>>, vector<16x4xf32>
    tpu.vector_store %arg17[%c0_139, %c0_140], %207 {strides = array<i32>} : memref<16x4xf32, #tpu.memory_space<vmem>>, vector<16x4xf32>,
    return
  }
}

</mosaic_0001>

<llo_original>
// kernel: gat_forward.1
$region0: #{gat_forward.1}
  #allocation0 [shape = 'u32[]', space=smem, size = 0x4, offset = 0x4, fixed_abs, tag = 'smem constant byte address 0x4 - core index']
  #allocation1 [shape = 'u32[144,128]{1,0:T(1,128)}', space=vmem, size = 0x12000, scoped, tag = 'internal scratch']
  #allocation2 [shape = 'bf16[8,16,8]{2,1,0:T(8,128)(2,1)}', space=vmem, size = 0x8000, scoped, tag = 'scratch operand']
  #allocation3 [shape = 'f32[8,16,8]{2,1,0:T(8,128)}', space=vmem, size = 0x10000, scoped, tag = 'scratch operand']
  #allocation4 [shape = 'bf16[4,16,8]{2,1,0:T(8,128)(2,1)}', space=vmem, size = 0x4000, scoped, tag = 'scratch operand']
  #allocation5 [shape = 'f32[4,16,8]{2,1,0:T(8,128)}', space=vmem, size = 0x8000, scoped, tag = 'scratch operand']
  #allocation6 [shape = 'bf16[2,16,8]{2,1,0:T(8,128)(2,1)}', space=vmem, size = 0x2000, scoped, tag = 'scratch operand']
  #allocation7 [shape = 'f32[2,16,8]{2,1,0:T(8,128)}', space=vmem, size = 0x4000, scoped, tag = 'scratch operand']
  %s0 = inlined_call_operand.vmem [shape: bf16[16,16], index: 0, kind: input, shape index: {}]
  %s1 = inlined_call_operand.vmem [shape: bf16[16,16], index: 1, kind: input, shape index: {}]
  %s2 = inlined_call_operand.vmem [shape: bf16[16,64], index: 2, kind: input, shape index: {}]
  %s3 = inlined_call_operand.vmem [shape: bf16[64,16], index: 3, kind: input, shape index: {}]
  %s4 = inlined_call_operand.vmem [shape: f32[1,64], index: 4, kind: input, shape index: {}]
  %s5 = inlined_call_operand.vmem [shape: f32[1,64], index: 5, kind: input, shape index: {}]
  %s6 = inlined_call_operand.vmem [shape: bf16[64,32], index: 6, kind: input, shape index: {}]
  %s7 = inlined_call_operand.vmem [shape: bf16[32,8], index: 7, kind: input, shape index: {}]
  %s8 = inlined_call_operand.vmem [shape: f32[1,32], index: 8, kind: input, shape index: {}]
  %s9 = inlined_call_operand.vmem [shape: f32[1,32], index: 9, kind: input, shape index: {}]
  %s10 = inlined_call_operand.vmem [shape: bf16[32,16], index: 10, kind: input, shape index: {}]
  %s11 = inlined_call_operand.vmem [shape: bf16[16,4], index: 11, kind: input, shape index: {}]
  %s12 = inlined_call_operand.vmem [shape: f32[1,16], index: 12, kind: input, shape index: {}]
  %s13 = inlined_call_operand.vmem [shape: f32[1,16], index: 13, kind: input, shape index: {}]
  %s14 = inlined_call_operand.vmem [shape: bf16[16,4], index: 14, kind: input, shape index: {}]
  %s15 = inlined_call_operand.vmem [shape: bf16[4,2], index: 15, kind: input, shape index: {}]
  %s16 = inlined_call_operand.vmem [shape: f32[1,4], index: 16, kind: input, shape index: {}]
  %s17 = inlined_call_operand.vmem [shape: f32[16,4], index: 17, kind: output, shape index: {}]
  %s18 = sld [smem:[#allocation0]]
  $region99: #{gat_forward.1} parent=0
    _
  %s20 = ssub.s32 1, %s18
  %s21 = scalar_select 0, %s20, %s18
  // Predicated region
  $region2: #{gat_forward.1} parent=0 // pred_check
    _
  $region3: #{gat_forward.1} parent=0 // pred_check_branch
    %23 = sbr.rel (0) target = $region5
  $region4: #{gat_forward.1} parent=0 // pred_region
    _
  $region5: #{gat_forward.1} parent=0 // pred_fallthru
    _
  // Predicated region
  $region6: #{gat_forward.1} parent=0 // pred_check
    _
  $region7: #{gat_forward.1} parent=0 // pred_check_branch
    %25 = sbr.rel (0) target = $region9
  $region8: #{gat_forward.1} parent=0 // pred_region
    _
  $region9: #{gat_forward.1} parent=0 // pred_fallthru
    _
  // Predicated region
  $region10: #{gat_forward.1} parent=0 // pred_check
    _
  $region11: #{gat_forward.1} parent=0 // pred_check_branch
    %27 = sbr.rel (0) target = $region13
  $region12: #{gat_forward.1} parent=0 // pred_region
    _
  $region13: #{gat_forward.1} parent=0 // pred_fallthru
    _
  // Predicated region
  $region14: #{gat_forward.1} parent=0 // pred_check
    _
  $region15: #{gat_forward.1} parent=0 // pred_check_branch
    %29 = sbr.rel (0) target = $region17
  $region16: #{gat_forward.1} parent=0 // pred_region
    _
  $region17: #{gat_forward.1} parent=0 // pred_fallthru
    _
  // Predicated region
  $region18: #{gat_forward.1} parent=0 // pred_check
    _
  $region19: #{gat_forward.1} parent=0 // pred_check_branch
    %31 = sbr.rel (0) target = $region21
  $region20: #{gat_forward.1} parent=0 // pred_region
    _
  $region21: #{gat_forward.1} parent=0 // pred_fallthru
    _
  // Predicated region
  $region22: #{gat_forward.1} parent=0 // pred_check
    _
  $region23: #{gat_forward.1} parent=0 // pred_check_branch
    %33 = sbr.rel (0) target = $region25
  $region24: #{gat_forward.1} parent=0 // pred_region
    _
  $region25: #{gat_forward.1} parent=0 // pred_fallthru
    _
  // Predicated region
  $region26: #{gat_forward.1} parent=0 // pred_check
    _
  $region27: #{gat_forward.1} parent=0 // pred_check_branch
    %35 = sbr.rel (0) target = $region29
  $region28: #{gat_forward.1} parent=0 // pred_region
    _
  $region29: #{gat_forward.1} parent=0 // pred_fallthru
    _
  // Predicated region
  $region30: #{gat_forward.1} parent=0 // pred_check
    _
  $region31: #{gat_forward.1} parent=0 // pred_check_branch
    %37 = sbr.rel (0) target = $region33
  $region32: #{gat_forward.1} parent=0 // pred_region
    _
  $region33: #{gat_forward.1} parent=0 // pred_fallthru
    _
  // Predicated region
  $region34: #{gat_forward.1} parent=0 // pred_check
    _
  $region35: #{gat_forward.1} parent=0 // pred_check_branch
    %39 = sbr.rel (0) target = $region37
  $region36: #{gat_forward.1} parent=0 // pred_region
    _
  $region37: #{gat_forward.1} parent=0 // pred_fallthru
    _
  // Predicated region
  $region38: #{gat_forward.1} parent=0 // pred_check
    _
  $region39: #{gat_forward.1} parent=0 // pred_check_branch
    %41 = sbr.rel (0) target = $region41
  $region40: #{gat_forward.1} parent=0 // pred_region
    _
  $region41: #{gat_forward.1} parent=0 // pred_fallthru
    _
  // Predicated region
  $region42: #{gat_forward.1} parent=0 // pred_check
    _
  $region43: #{gat_forward.1} parent=0 // pred_check_branch
    %43 = sbr.rel (0) target = $region45
  $region44: #{gat_forward.1} parent=0 // pred_region
    _
  $region45: #{gat_forward.1} parent=0 // pred_fallthru
    _
  // Predicated region
  $region46: #{gat_forward.1} parent=0 // pred_check
    _
  $region47: #{gat_forward.1} parent=0 // pred_check_branch
    %45 = sbr.rel (0) target = $region49
  $region48: #{gat_forward.1} parent=0 // pred_region
    _
  $region49: #{gat_forward.1} parent=0 // pred_fallthru
    _
  // Predicated region
  $region50: #{gat_forward.1} parent=0 // pred_check
    _
  $region51: #{gat_forward.1} parent=0 // pred_check_branch
    %47 = sbr.rel (0) target = $region53
  $region52: #{gat_forward.1} parent=0 // pred_region
    _
  $region53: #{gat_forward.1} parent=0 // pred_fallthru
    _
  // Predicated region
  $region54: #{gat_forward.1} parent=0 // pred_check
    _
  $region55: #{gat_forward.1} parent=0 // pred_check_branch
    %49 = sbr.rel (0) target = $region57
  $region56: #{gat_forward.1} parent=0 // pred_region
    _
  $region57: #{gat_forward.1} parent=0 // pred_fallthru
    _
  // Predicated region
  $region58: #{gat_forward.1} parent=0 // pred_check
    _
  $region59: #{gat_forward.1} parent=0 // pred_check_branch
    %51 = sbr.rel (0) target = $region61
  $region60: #{gat_forward.1} parent=0 // pred_region
    _
  $region61: #{gat_forward.1} parent=0 // pred_fallthru
    _
  // Predicated region
  $region62: #{gat_forward.1} parent=0 // pred_check
    _
  $region63: #{gat_forward.1} parent=0 // pred_check_branch
    %53 = sbr.rel (0) target = $region65
  $region64: #{gat_forward.1} parent=0 // pred_region
    _
  $region65: #{gat_forward.1} parent=0 // pred_fallthru
    _
  // Predicated region
  $region66: #{gat_forward.1} parent=0 // pred_check
    _
  $region67: #{gat_forward.1} parent=0 // pred_check_branch
    %55 = sbr.rel (0) target = $region69
  $region68: #{gat_forward.1} parent=0 // pred_region
    _
  $region69: #{gat_forward.1} parent=0 // pred_fallthru
    _
  %v57 = vld [vmem:[%s1] sm:$0xf]
  %v58 = vld [vmem:[%s1 + $0x4] sm:$0xf]
  %v59 = vunpack.c.l.bf16 %v57
  %v60 = vunpack.c.l.bf16 %v58
  %v61 = vld [vmem:[%s0] sm:$0xf]
  %v62 = vld [vmem:[%s0 + $0x4] sm:$0xf]
  %v63 = vld [vmem:[%s2] sm:$0xf]
  %v64 = vld [vmem:[%s2 + $0x4] sm:$0xf]
  %v67 = vunpack.c.l.b16 %v61
  %v68 = vunpack.c.l.b16 %v62
  %v69 = vpack.c.b16 %v68, %v67
  %v72 = vunpack.c.l.b16 %v63
  %v73 = vunpack.c.l.b16 %v64
  %v74 = vpack.c.b16 %v73, %v72
  %vm76 = vcmask 130048
  %v78 = vsel %vm76, %v69, 0
  %80 = vmatprep.subr.bf16.mxu0 0
  %81 = vmatpush1.bf16.msra.mxu0 0
  %82 = vmatprep.subr.bf16.mxu0 0
  %83 = vmatpush1.bf16.msra.mxu0 0
  %84 = vmatprep.subr.bf16.mxu0 0
  %85 = vmatpush1.bf16.msra.mxu0 0
  %86 = vmatprep.subr.bf16.mxu0 0
  %87 = vmatpush1.bf16.msra.mxu0 0
  %88 = vmatprep.subr.bf16.mxu0 0
  %89 = vmatpush1.bf16.msra.mxu0 0
  %90 = vmatprep.subr.bf16.mxu0 0
  %91 = vmatpush1.bf16.msra.mxu0 0
  %92 = vmatprep.subr.bf16.mxu0 0
  %93 = vmatpush1.bf16.msra.mxu0 0
  %94 = vmatprep.subr.bf16.mxu0 0
  %95 = vmatpush1.bf16.msra.mxu0 %v74
  %96 = vmatprep.subr.bf16.mxu0 0
  %97 = vmatpush2.bf16.msra.mxu0 0
  %98 = vmatprep.subr.bf16.mxu0 0
  %99 = vmatpush2.bf16.msra.mxu0 0
  %100 = vmatprep.subr.bf16.mxu0 0
  %101 = vmatpush2.bf16.msra.mxu0 0
  %102 = vmatprep.subr.bf16.mxu0 0
  %103 = vmatpush2.bf16.msra.mxu0 0
  %104 = vmatprep.subr.bf16.mxu0 0
  %105 = vmatpush2.bf16.msra.mxu0 0
  %106 = vmatprep.subr.bf16.mxu0 0
  %107 = vmatpush2.bf16.msra.mxu0 0
  %108 = vmatprep.subr.bf16.mxu0 0
  %109 = vmatpush2.bf16.msra.mxu0 0
  %110 = vmatprep.subr.bf16.mxu0 0
  %111 = vmatpush2.bf16.msra.mxu0 0
  %112 = vmatprep.mubr.bf16.mxu0 0
  %113 = vmatmul.mubr.bf16.gmra.mxu0 %v78
  %v114 = vpop.f32.mrf.mxu0
  %v115 = vadd.f32 0.0, %v114
  %v116 = vpop.f32.mrf.mxu0
  %v117 = vpop.f32.mrf.mxu0
  %v118 = vadd.f32 0.0, %v117
  %v119 = vpop.f32.mrf.mxu0
  %120 = vdwg.mxu0
  %v121 = vpack.c.bf16 %v118, %v115
  %v122 = vld [vmem:[%s3] sm:$0xf]
  %v123 = vld [vmem:[%s3 + $0x4] sm:$0xf]
  %v124 = vld [vmem:[%s3 + $0x8] sm:$0xf]
  %v125 = vld [vmem:[%s3 + $0xc] sm:$0xf]
  %v126 = vld [vmem:[%s3 + $0x10] sm:$0xf]
  %v127 = vld [vmem:[%s3 + $0x14] sm:$0xf]
  %v128 = vld [vmem:[%s3 + $0x18] sm:$0xf]
  %v129 = vld [vmem:[%s3 + $0x1c] sm:$0xf]
  %v138 = vunpack.c.l.b16 %v122
  %v139 = vunpack.c.l.b16 %v123
  %v140 = vunpack.c.l.b16 %v124
  %v141 = vunpack.c.l.b16 %v125
  %v142 = vunpack.c.l.b16 %v126
  %v143 = vunpack.c.l.b16 %v127
  %v144 = vunpack.c.l.b16 %v128
  %v145 = vunpack.c.l.b16 %v129
  %v146 = vpack.c.b16 %v139, %v138
  %v147 = vpack.c.b16 %v141, %v140
  %v148 = vpack.c.b16 %v143, %v142
  %v149 = vpack.c.b16 %v145, %v144
  %vm154 = vcmask 523264
  %v156 = vsel %vm154, %v121, 0
  %158 = vmatprep.subr.bf16.mxu0 0
  %159 = vmatpush1.bf16.msra.mxu0 0
  %160 = vmatprep.subr.bf16.mxu0 0
  %161 = vmatpush1.bf16.msra.mxu0 0
  %162 = vmatprep.subr.bf16.mxu0 0
  %163 = vmatpush1.bf16.msra.mxu0 0
  %164 = vmatprep.subr.bf16.mxu0 0
  %165 = vmatpush1.bf16.msra.mxu0 0
  %166 = vmatprep.subr.bf16.mxu0 0
  %167 = vmatpush1.bf16.msra.mxu0 %v149
  %168 = vmatprep.subr.bf16.mxu0 0
  %169 = vmatpush1.bf16.msra.mxu0 %v148
  %170 = vmatprep.subr.bf16.mxu0 0
  %171 = vmatpush1.bf16.msra.mxu0 %v147
  %172 = vmatprep.subr.bf16.mxu0 0
  %173 = vmatpush1.bf16.msra.mxu0 %v146
  %174 = vmatprep.subr.bf16.mxu0 0
  %175 = vmatpush2.bf16.msra.mxu0 0
  %176 = vmatprep.subr.bf16.mxu0 0
  %177 = vmatpush2.bf16.msra.mxu0 0
  %178 = vmatprep.subr.bf16.mxu0 0
  %179 = vmatpush2.bf16.msra.mxu0 0
  %180 = vmatprep.subr.bf16.mxu0 0
  %181 = vmatpush2.bf16.msra.mxu0 0
  %182 = vmatprep.subr.bf16.mxu0 0
  %183 = vmatpush2.bf16.msra.mxu0 0
  %184 = vmatprep.subr.bf16.mxu0 0
  %185 = vmatpush2.bf16.msra.mxu0 0
  %186 = vmatprep.subr.bf16.mxu0 0
  %187 = vmatpush2.bf16.msra.mxu0 0
  %188 = vmatprep.subr.bf16.mxu0 0
  %189 = vmatpush2.bf16.msra.mxu0 0
  %190 = vmatprep.mubr.bf16.mxu0 0
  %191 = vmatmul.mubr.bf16.gmra.mxu0 %v156
  %v192 = vpop.f32.mrf.mxu0
  %v193 = vadd.f32 0.0, %v192
  %v194 = vpop.f32.mrf.mxu0
  %v195 = vpop.f32.mrf.mxu0
  %v196 = vadd.f32 0.0, %v195
  %v197 = vpop.f32.mrf.mxu0
  %198 = vdwg.mxu0
  %199 = vxpose.xlu0.b32.start [1/16] %v193, 128
  %200 = vxpose.xlu0.b32.cont [2/16] %v196, 128
  %201 = vxpose.xlu0.b32.cont [3/16] 0.0, 128
  %202 = vxpose.xlu0.b32.cont [4/16] 0.0, 128
  %203 = vxpose.xlu0.b32.cont [5/16] 0.0, 128
  %204 = vxpose.xlu0.b32.cont [6/16] 0.0, 128
  %205 = vxpose.xlu0.b32.cont [7/16] 0.0, 128
  %206 = vxpose.xlu0.b32.cont [8/16] 0.0, 128
  %207 = vxpose.xlu0.b32.cont [9/16] 0.0, 128
  %208 = vxpose.xlu0.b32.cont [10/16] 0.0, 128
  %209 = vxpose.xlu0.b32.cont [11/16] 0.0, 128
  %210 = vxpose.xlu0.b32.cont [12/16] 0.0, 128
  %211 = vxpose.xlu0.b32.cont [13/16] 0.0, 128
  %212 = vxpose.xlu0.b32.cont [14/16] 0.0, 128
  %213 = vxpose.xlu0.b32.cont [15/16] 0.0, 128
  %214 = vxpose.xlu0.b32.end [16/16] 0.0, 128
  %v215 = vpop.trf.xlu0
  %v216 = vpop.trf.xlu0
  %v217 = vpop.trf.xlu0
  %v218 = vpop.trf.xlu0
  %v219 = vpop.trf.xlu0
  %v220 = vpop.trf.xlu0
  %v221 = vpop.trf.xlu0
  %v222 = vpop.trf.xlu0
  %v223 = vpop.trf.xlu0
  %v224 = vpop.trf.xlu0
  %v225 = vpop.trf.xlu0
  %v226 = vpop.trf.xlu0
  %v227 = vpop.trf.xlu0
  %v228 = vpop.trf.xlu0
  %v229 = vpop.trf.xlu0
  %v230 = vpop.trf.xlu0
  %v232 = vunpack.c.l.b16 %v121
  %v233 = vunpack.c.h.b16 %v121
  %v234 = vpack.c.b16 %v232, %v232
  %v235 = vpack.c.b16 %v233, %v233
  %vm238 = vcmask 60416
  %239 = vst.msk [vmem:[#allocation2] sm:$0xf] %vm238, %v234
  %240 = vst.msk [vmem:[#allocation2 + $0x4] sm:$0xf] %vm238, %v235
  %241 = vrot.lane.b32.xlu0 %v234, 120
  %v242 = vpop.permute.xlu0 %241
  %243 = vrot.lane.b32.xlu0 %v235, 120
  %v244 = vpop.permute.xlu0 %243
  %s247 = scalar_lea.vmem [#allocation2], 8
  %248 = vst.msk [vmem:[%s247] sm:$0xf] %vm238, %v242
  %249 = vst.msk [vmem:[%s247 + $0x4] sm:$0xf] %vm238, %v244
  %250 = vrot.lane.b32.xlu0 %v234, 112
  %v251 = vpop.permute.xlu0 %250
  %252 = vrot.lane.b32.xlu0 %v235, 112
  %v253 = vpop.permute.xlu0 %252
  %s256 = scalar_lea.vmem [#allocation2], 16
  %257 = vst.msk [vmem:[%s256] sm:$0xf] %vm238, %v251
  %258 = vst.msk [vmem:[%s256 + $0x4] sm:$0xf] %vm238, %v253
  %259 = vrot.lane.b32.xlu0 %v234, 104
  %v260 = vpop.permute.xlu0 %259
  %261 = vrot.lane.b32.xlu0 %v235, 104
  %v262 = vpop.permute.xlu0 %261
  %s265 = scalar_lea.vmem [#allocation2], 24
  %266 = vst.msk [vmem:[%s265] sm:$0xf] %vm238, %v260
  %267 = vst.msk [vmem:[%s265 + $0x4] sm:$0xf] %vm238, %v262
  %268 = vrot.lane.b32.xlu0 %v234, 96
  %v269 = vpop.permute.xlu0 %268
  %270 = vrot.lane.b32.xlu0 %v235, 96
  %v271 = vpop.permute.xlu0 %270
  %s274 = scalar_lea.vmem [#allocation2], 32
  %275 = vst.msk [vmem:[%s274] sm:$0xf] %vm238, %v269
  %276 = vst.msk [vmem:[%s274 + $0x4] sm:$0xf] %vm238, %v271
  %277 = vrot.lane.b32.xlu0 %v234, 88
  %v278 = vpop.permute.xlu0 %277
  %279 = vrot.lane.b32.xlu0 %v235, 88
  %v280 = vpop.permute.xlu0 %279
  %s283 = scalar_lea.vmem [#allocation2], 40
  %284 = vst.msk [vmem:[%s283] sm:$0xf] %vm238, %v278
  %285 = vst.msk [vmem:[%s283 + $0x4] sm:$0xf] %vm238, %v280
  %286 = vrot.lane.b32.xlu0 %v234, 80
  %v287 = vpop.permute.xlu0 %286
  %288 = vrot.lane.b32.xlu0 %v235, 80
  %v289 = vpop.permute.xlu0 %288
  %s292 = scalar_lea.vmem [#allocation2], 48
  %293 = vst.msk [vmem:[%s292] sm:$0xf] %vm238, %v287
  %294 = vst.msk [vmem:[%s292 + $0x4] sm:$0xf] %vm238, %v289
  %295 = vrot.lane.b32.xlu0 %v234, 72
  %v296 = vpop.permute.xlu0 %295
  %297 = vrot.lane.b32.xlu0 %v235, 72
  %v298 = vpop.permute.xlu0 %297
  %s301 = scalar_lea.vmem [#allocation2], 56
  %302 = vst.msk [vmem:[%s301] sm:$0xf] %vm238, %v296
  %303 = vst.msk [vmem:[%s301 + $0x4] sm:$0xf] %vm238, %v298
  %v304 = vlaneseq
  %v305 = vand.u32 %v304, 127
  %v306 = vlaneseq
  %v307 = vshrl.u32 %v306, 7
  loop: start=0, step=1, limit=8
  $region70: #{gat_forward.1} parent=0 // loop_pre_header
    _
  $region71: #{gat_forward.1} parent=0 // loop_header
    %s309 = sphi 0, %s313
    %p310 = scmp.ge.s32.totalorder %s309, 8
  $region72: #{gat_forward.1} parent=0 // loop_header_branch
    %312 = sbr.rel (%p310) target = $region76
  $region73: #{gat_forward.1} parent=0 // loop_body
    %v314 = vstv %s309
    %vm315 = vcmp.eq.s32.totalorder %v305, %v314
    %v316 = vsel %vm315, 1, 0
    %vm317 = vcmp.eq.s32.totalorder %v316, 1
    %320 = vrot.lane.b32.xlu0 %v193, 120
    %v321 = vpop.permute.xlu0 %320
    %322 = vrot.lane.b32.xlu0 %v196, 120
    %v323 = vpop.permute.xlu0 %322
    %v326 = vsel %vm317, %v321, 0.0
    %v327 = vsel %vm317, %v323, 0.0
    %vm328 = vcmask 64512
    %v329 = vsel %vm328, %v326, 0.0
    %330 = vadd.xlane.f32.xlu0 %v329
    %v331 = vpop.xlane.xlu0 %330
    %v332 = vsel %vm328, %v327, 0.0
    %333 = vadd.xlane.f32.xlu0 %v332
    %v334 = vpop.xlane.xlu0 %333
    %vm335 = vcmp.eq.s32.totalorder %v307, %v314
    %v336 = vsel %vm335, 1, 0
    %vm337 = vcmp.eq.s32.totalorder %v336, 1
    %v338 = vsel %vm337, %v215, 0.0
    %v339 = vsel %vm76, %v338, 0.0
    %v340 = vrot.slane %v339, 4
    %v341 = vadd.f32 %v339, %v340
    %v342 = vrot.slane %v341, 2
    %v343 = vadd.f32 %v341, %v342
    %v344 = vrot.slane %v343, 1
    %v345 = vadd.f32 %v343, %v344
    %s346 = smul.u32 %s309, 2
    %s347 = smul.addr %s346, 4
    %s348 = scalar_lea.vmem [#allocation2], %s347
    %v349 = vld [vmem:[%s348] sm:$0xf]
    %v350 = vld [vmem:[%s348 + $0x4] sm:$0xf]
    %v351 = vadd.f32 %v331, %v345
    %v352 = vadd.f32 %v334, %v345
    %v353 = vmul.f32 %v351, 0.2
    %v354 = vmul.f32 %v352, 0.2
    %v355 = vmax.f32 %v351, %v353
    %v356 = vmax.f32 %v352, %v354
    %v357 = vadd.f32 %v355, %v59
    %v358 = vadd.f32 %v356, %v60
    %v359 = vsel %vm76, %v357, -inf
    %360 = vmax.xlane.f32.xlu0 %v359
    %v361 = vpop.xlane.xlu0 %360
    %v362 = vsel %vm76, %v358, -inf
    %363 = vmax.xlane.f32.xlu0 %v362
    %v364 = vpop.xlane.xlu0 %363
    %v365 = vsub.f32 %v357, %v361
    %v366 = vsub.f32 %v358, %v364
    %v367 = vmul.f32 %v365, 1.442695
    %v368 = vpow.pop %v367
    %v369 = vmul.f32 %v366, 1.442695
    %v370 = vpow.pop %v369
    %v371 = vsel %vm76, %v368, 0.0
    %372 = vadd.xlane.f32.xlu0 %v371
    %v373 = vpop.xlane.xlu0 %372
    %v374 = vsel %vm76, %v370, 0.0
    %375 = vadd.xlane.f32.xlu0 %v374
    %v376 = vpop.xlane.xlu0 %375
    %v377 = vrcp.pop %v373
    %v378 = vrcp.pop %v376
    %v379 = vpack.c.bf16 %v370, %v368
    %v382 = vunpack.c.l.b16 %v349
    %v383 = vunpack.c.l.b16 %v350
    %v384 = vpack.c.b16 %v383, %v382
    %v387 = vsel %vm76, %v379, 0
    %389 = vmatprep.subr.bf16.mxu0 0
    %390 = vmatpush1.bf16.msra.mxu0 0
    %391 = vmatprep.subr.bf16.mxu0 0
    %392 = vmatpush1.bf16.msra.mxu0 0
    %393 = vmatprep.subr.bf16.mxu0 0
    %394 = vmatpush1.bf16.msra.mxu0 0
    %395 = vmatprep.subr.bf16.mxu0 0
    %396 = vmatpush1.bf16.msra.mxu0 0
    %397 = vmatprep.subr.bf16.mxu0 0
    %398 = vmatpush1.bf16.msra.mxu0 0
    %399 = vmatprep.subr.bf16.mxu0 0
    %400 = vmatpush1.bf16.msra.mxu0 0
    %401 = vmatprep.subr.bf16.mxu0 0
    %402 = vmatpush1.bf16.msra.mxu0 0
    %403 = vmatprep.subr.bf16.mxu0 0
    %404 = vmatpush1.bf16.msra.mxu0 %v384
    %405 = vmatprep.subr.bf16.mxu0 0
    %406 = vmatpush2.bf16.msra.mxu0 0
    %407 = vmatprep.subr.bf16.mxu0 0
    %408 = vmatpush2.bf16.msra.mxu0 0
    %409 = vmatprep.subr.bf16.mxu0 0
    %410 = vmatpush2.bf16.msra.mxu0 0
    %411 = vmatprep.subr.bf16.mxu0 0
    %412 = vmatpush2.bf16.msra.mxu0 0
    %413 = vmatprep.subr.bf16.mxu0 0
    %414 = vmatpush2.bf16.msra.mxu0 0
    %415 = vmatprep.subr.bf16.mxu0 0
    %416 = vmatpush2.bf16.msra.mxu0 0
    %417 = vmatprep.subr.bf16.mxu0 0
    %418 = vmatpush2.bf16.msra.mxu0 0
    %419 = vmatprep.subr.bf16.mxu0 0
    %420 = vmatpush2.bf16.msra.mxu0 0
    %421 = vmatprep.mubr.bf16.mxu0 0
    %422 = vmatmul.mubr.bf16.gmra.mxu0 %v387
    %v423 = vpop.f32.mrf.mxu0
    %v424 = vadd.f32 0.0, %v423
    %v425 = vpop.f32.mrf.mxu0
    %v426 = vpop.f32.mrf.mxu0
    %v427 = vadd.f32 0.0, %v426
    %v428 = vpop.f32.mrf.mxu0
    %429 = vdwg.mxu0
    %v430 = vmul.f32 %v377, %v424
    %v431 = vmul.f32 %v378, %v427
    %s432 = smul.u32 %s309, 16
    %s433 = scalar_lea.vmem [#allocation3], %s432
    %434 = vst.msk [vmem:[%s433] sm:$0xff] %vm328, %v430
    %435 = vst.msk [vmem:[%s433 + $0x8] sm:$0xff] %vm328, %v431
  $region74: #{gat_forward.1} parent=0 // loop_footer
    %s313 = sadd.s32 1, %s309
  $region75: #{gat_forward.1} parent=0 // loop_footer_branch
    %308 = sbr.rel target = $region71
  $region76: #{gat_forward.1} parent=0 // loop_exit
    _
  %v436 = vld [vmem:[#allocation3] sm:$0xff]
  %v437 = vld [vmem:[#allocation3 + $0x8] sm:$0xff]
  %s438 = scalar_lea.vmem [#allocation3], 16
  %v439 = vld [vmem:[%s438] sm:$0xff]
  %v440 = vld [vmem:[%s438 + $0x8] sm:$0xff]
  %s441 = scalar_lea.vmem [#allocation3], 32
  %v442 = vld [vmem:[%s441] sm:$0xff]
  %v443 = vld [vmem:[%s441 + $0x8] sm:$0xff]
  %s444 = scalar_lea.vmem [#allocation3], 48
  %v445 = vld [vmem:[%s444] sm:$0xff]
  %v446 = vld [vmem:[%s444 + $0x8] sm:$0xff]
  %s447 = scalar_lea.vmem [#allocation3], 64
  %v448 = vld [vmem:[%s447] sm:$0xff]
  %v449 = vld [vmem:[%s447 + $0x8] sm:$0xff]
  %s450 = scalar_lea.vmem [#allocation3], 80
  %v451 = vld [vmem:[%s450] sm:$0xff]
  %v452 = vld [vmem:[%s450 + $0x8] sm:$0xff]
  %s453 = scalar_lea.vmem [#allocation3], 96
  %v454 = vld [vmem:[%s453] sm:$0xff]
  %v455 = vld [vmem:[%s453 + $0x8] sm:$0xff]
  %s456 = scalar_lea.vmem [#allocation3], 112
  %v457 = vld [vmem:[%s456] sm:$0xff]
  %v458 = vld [vmem:[%s456 + $0x8] sm:$0xff]
  %461 = vrot.lane.b32.xlu0 %v439, 8
  %v462 = vpop.permute.xlu0 %461
  %463 = vrot.lane.b32.xlu0 %v440, 8
  %v464 = vpop.permute.xlu0 %463
  %469 = vrot.lane.b32.xlu0 %v442, 16
  %v470 = vpop.permute.xlu0 %469
  %471 = vrot.lane.b32.xlu0 %v443, 16
  %v472 = vpop.permute.xlu0 %471
  %477 = vrot.lane.b32.xlu0 %v445, 24
  %v478 = vpop.permute.xlu0 %477
  %479 = vrot.lane.b32.xlu0 %v446, 24
  %v480 = vpop.permute.xlu0 %479
  %485 = vrot.lane.b32.xlu0 %v448, 32
  %v486 = vpop.permute.xlu0 %485
  %487 = vrot.lane.b32.xlu0 %v449, 32
  %v488 = vpop.permute.xlu0 %487
  %493 = vrot.lane.b32.xlu0 %v451, 40
  %v494 = vpop.permute.xlu0 %493
  %495 = vrot.lane.b32.xlu0 %v452, 40
  %v496 = vpop.permute.xlu0 %495
  %501 = vrot.lane.b32.xlu0 %v454, 48
  %v502 = vpop.permute.xlu0 %501
  %503 = vrot.lane.b32.xlu0 %v455, 48
  %v504 = vpop.permute.xlu0 %503
  %509 = vrot.lane.b32.xlu0 %v457, 56
  %v510 = vpop.permute.xlu0 %509
  %511 = vrot.lane.b32.xlu0 %v458, 56
  %v512 = vpop.permute.xlu0 %511
  %vm515 = vcmask 64512
  %v516 = vsel %vm515, %v436, %v462
  %v517 = vsel %vm515, %v437, %v464
  %v518 = vsel %vm76, %v516, %v470
  %v519 = vsel %vm76, %v517, %v472
  %vm520 = vcmask 195584
  %v521 = vsel %vm520, %v518, %v478
  %v522 = vsel %vm520, %v519, %v480
  %vm523 = vcmask 261120
  %v524 = vsel %vm523, %v521, %v486
  %v525 = vsel %vm523, %v522, %v488
  %vm526 = vcmask 326656
  %v527 = vsel %vm526, %v524, %v494
  %v528 = vsel %vm526, %v525, %v496
  %vm529 = vcmask 392192
  %v530 = vsel %vm529, %v527, %v502
  %v531 = vsel %vm529, %v528, %v504
  %vm532 = vcmask 457728
  %v533 = vsel %vm532, %v530, %v510
  %v534 = vsel %vm532, %v531, %v512
  %v535 = vld [vmem:[%s4] sm:$0x1]
  %v537 = vlaneseq
  %v538 = vshrl.u32 %v537, 7
  %v539 = vsub.s32 0, %v538
  %v540 = vrot.slane %v535, %v539
  %v542 = vmul.f32 %v533, %v540
  %v543 = vmul.f32 %v534, %v540
  %v544 = vld [vmem:[%s5] sm:$0x1]
  %v546 = vlaneseq
  %v547 = vshrl.u32 %v546, 7
  %v548 = vsub.s32 0, %v547
  %v549 = vrot.slane %v544, %v548
  %v551 = vadd.f32 %v542, %v549
  %v552 = vadd.f32 %v543, %v549
  %vm553 = vcmp.gt.f32.partialorder %v551, 0.0
  %vm554 = vcmp.gt.f32.partialorder %v552, 0.0
  %v555 = vmin.f32 %v551, 0.0
  %v556 = vmin.f32 %v552, 0.0
  %v557 = vmul.f32 %v555, 1.442695
  %v558 = vpow.pop %v557
  %v559 = vmul.f32 %v556, 1.442695
  %v560 = vpow.pop %v559
  %v561 = vsub.f32 %v558, 1.0
  %v562 = vsub.f32 %v560, 1.0
  %v563 = vsel %vm553, %v551, %v561
  %v564 = vsel %vm554, %v552, %v562
  %v565 = vpack.c.bf16 %v564, %v563
  %v566 = vld [vmem:[%s6] sm:$0xf]
  %v567 = vld [vmem:[%s6 + $0x4] sm:$0xf]
  %v568 = vld [vmem:[%s6 + $0x8] sm:$0xf]
  %v569 = vld [vmem:[%s6 + $0xc] sm:$0xf]
  %v570 = vld [vmem:[%s6 + $0x10] sm:$0xf]
  %v571 = vld [vmem:[%s6 + $0x14] sm:$0xf]
  %v572 = vld [vmem:[%s6 + $0x18] sm:$0xf]
  %v573 = vld [vmem:[%s6 + $0x1c] sm:$0xf]
  %v582 = vunpack.c.l.b16 %v566
  %v583 = vunpack.c.l.b16 %v567
  %v584 = vunpack.c.l.b16 %v568
  %v585 = vunpack.c.l.b16 %v569
  %v586 = vunpack.c.l.b16 %v570
  %v587 = vunpack.c.l.b16 %v571
  %v588 = vunpack.c.l.b16 %v572
  %v589 = vunpack.c.l.b16 %v573
  %v590 = vpack.c.b16 %v583, %v582
  %v591 = vpack.c.b16 %v585, %v584
  %v592 = vpack.c.b16 %v587, %v586
  %v593 = vpack.c.b16 %v589, %v588
  %v599 = vsel %vm154, %v565, 0
  %601 = vmatprep.subr.bf16.mxu0 0
  %602 = vmatpush1.bf16.msra.mxu0 0
  %603 = vmatprep.subr.bf16.mxu0 0
  %604 = vmatpush1.bf16.msra.mxu0 0
  %605 = vmatprep.subr.bf16.mxu0 0
  %606 = vmatpush1.bf16.msra.mxu0 0
  %607 = vmatprep.subr.bf16.mxu0 0
  %608 = vmatpush1.bf16.msra.mxu0 0
  %609 = vmatprep.subr.bf16.mxu0 0
  %610 = vmatpush1.bf16.msra.mxu0 %v593
  %611 = vmatprep.subr.bf16.mxu0 0
  %612 = vmatpush1.bf16.msra.mxu0 %v592
  %613 = vmatprep.subr.bf16.mxu0 0
  %614 = vmatpush1.bf16.msra.mxu0 %v591
  %615 = vmatprep.subr.bf16.mxu0 0
  %616 = vmatpush1.bf16.msra.mxu0 %v590
  %617 = vmatprep.subr.bf16.mxu0 0
  %618 = vmatpush2.bf16.msra.mxu0 0
  %619 = vmatprep.subr.bf16.mxu0 0
  %620 = vmatpush2.bf16.msra.mxu0 0
  %621 = vmatprep.subr.bf16.mxu0 0
  %622 = vmatpush2.bf16.msra.mxu0 0
  %623 = vmatprep.subr.bf16.mxu0 0
  %624 = vmatpush2.bf16.msra.mxu0 0
  %625 = vmatprep.subr.bf16.mxu0 0
  %626 = vmatpush2.bf16.msra.mxu0 0
  %627 = vmatprep.subr.bf16.mxu0 0
  %628 = vmatpush2.bf16.msra.mxu0 0
  %629 = vmatprep.subr.bf16.mxu0 0
  %630 = vmatpush2.bf16.msra.mxu0 0
  %631 = vmatprep.subr.bf16.mxu0 0
  %632 = vmatpush2.bf16.msra.mxu0 0
  %633 = vmatprep.mubr.bf16.mxu0 0
  %634 = vmatmul.mubr.bf16.gmra.mxu0 %v599
  %v635 = vpop.f32.mrf.mxu0
  %v636 = vadd.f32 0.0, %v635
  %v637 = vpop.f32.mrf.mxu0
  %v638 = vpop.f32.mrf.mxu0
  %v639 = vadd.f32 0.0, %v638
  %v640 = vpop.f32.mrf.mxu0
  %641 = vdwg.mxu0
  %v642 = vpack.c.bf16 %v639, %v636
  %v643 = vld [vmem:[%s7] sm:$0xf]
  %v644 = vld [vmem:[%s7 + $0x4] sm:$0xf]
  %v645 = vld [vmem:[%s7 + $0x8] sm:$0xf]
  %v646 = vld [vmem:[%s7 + $0xc] sm:$0xf]
  %v651 = vunpack.c.l.b16 %v643
  %v652 = vunpack.c.l.b16 %v644
  %v653 = vunpack.c.l.b16 %v645
  %v654 = vunpack.c.l.b16 %v646
  %v655 = vpack.c.b16 %v652, %v651
  %v656 = vpack.c.b16 %v654, %v653
  %v660 = vsel %vm523, %v642, 0
  %662 = vmatprep.subr.bf16.mxu0 0
  %663 = vmatpush1.bf16.msra.mxu0 0
  %664 = vmatprep.subr.bf16.mxu0 0
  %665 = vmatpush1.bf16.msra.mxu0 0
  %666 = vmatprep.subr.bf16.mxu0 0
  %667 = vmatpush1.bf16.msra.mxu0 0
  %668 = vmatprep.subr.bf16.mxu0 0
  %669 = vmatpush1.bf16.msra.mxu0 0
  %670 = vmatprep.subr.bf16.mxu0 0
  %671 = vmatpush1.bf16.msra.mxu0 0
  %672 = vmatprep.subr.bf16.mxu0 0
  %673 = vmatpush1.bf16.msra.mxu0 0
  %674 = vmatprep.subr.bf16.mxu0 0
  %675 = vmatpush1.bf16.msra.mxu0 %v656
  %676 = vmatprep.subr.bf16.mxu0 0
  %677 = vmatpush1.bf16.msra.mxu0 %v655
  %678 = vmatprep.subr.bf16.mxu0 0
  %679 = vmatpush2.bf16.msra.mxu0 0
  %680 = vmatprep.subr.bf16.mxu0 0
  %681 = vmatpush2.bf16.msra.mxu0 0
  %682 = vmatprep.subr.bf16.mxu0 0
  %683 = vmatpush2.bf16.msra.mxu0 0
  %684 = vmatprep.subr.bf16.mxu0 0
  %685 = vmatpush2.bf16.msra.mxu0 0
  %686 = vmatprep.subr.bf16.mxu0 0
  %687 = vmatpush2.bf16.msra.mxu0 0
  %688 = vmatprep.subr.bf16.mxu0 0
  %689 = vmatpush2.bf16.msra.mxu0 0
  %690 = vmatprep.subr.bf16.mxu0 0
  %691 = vmatpush2.bf16.msra.mxu0 0
  %692 = vmatprep.subr.bf16.mxu0 0
  %693 = vmatpush2.bf16.msra.mxu0 0
  %694 = vmatprep.mubr.bf16.mxu0 0
  %695 = vmatmul.mubr.bf16.gmra.mxu0 %v660
  %v696 = vpop.f32.mrf.mxu0
  %v697 = vadd.f32 0.0, %v696
  %v698 = vpop.f32.mrf.mxu0
  %v699 = vpop.f32.mrf.mxu0
  %v700 = vadd.f32 0.0, %v699
  %v701 = vpop.f32.mrf.mxu0
  %702 = vdwg.mxu0
  %703 = vxpose.xlu0.b32.start [1/16] %v697, 128
  %704 = vxpose.xlu0.b32.cont [2/16] %v700, 128
  %705 = vxpose.xlu0.b32.cont [3/16] 0.0, 128
  %706 = vxpose.xlu0.b32.cont [4/16] 0.0, 128
  %707 = vxpose.xlu0.b32.cont [5/16] 0.0, 128
  %708 = vxpose.xlu0.b32.cont [6/16] 0.0, 128
  %709 = vxpose.xlu0.b32.cont [7/16] 0.0, 128
  %710 = vxpose.xlu0.b32.cont [8/16] 0.0, 128
  %711 = vxpose.xlu0.b32.cont [9/16] 0.0, 128
  %712 = vxpose.xlu0.b32.cont [10/16] 0.0, 128
  %713 = vxpose.xlu0.b32.cont [11/16] 0.0, 128
  %714 = vxpose.xlu0.b32.cont [12/16] 0.0, 128
  %715 = vxpose.xlu0.b32.cont [13/16] 0.0, 128
  %716 = vxpose.xlu0.b32.cont [14/16] 0.0, 128
  %717 = vxpose.xlu0.b32.cont [15/16] 0.0, 128
  %718 = vxpose.xlu0.b32.end [16/16] 0.0, 128
  %v719 = vpop.trf.xlu0
  %v720 = vpop.trf.xlu0
  %v721 = vpop.trf.xlu0
  %v722 = vpop.trf.xlu0
  %v723 = vpop.trf.xlu0
  %v724 = vpop.trf.xlu0
  %v725 = vpop.trf.xlu0
  %v726 = vpop.trf.xlu0
  %v727 = vpop.trf.xlu0
  %v728 = vpop.trf.xlu0
  %v729 = vpop.trf.xlu0
  %v730 = vpop.trf.xlu0
  %v731 = vpop.trf.xlu0
  %v732 = vpop.trf.xlu0
  %v733 = vpop.trf.xlu0
  %v734 = vpop.trf.xlu0
  %v736 = vunpack.c.l.b16 %v642
  %v737 = vunpack.c.h.b16 %v642
  %v738 = vpack.c.b16 %v736, %v736
  %v739 = vpack.c.b16 %v737, %v737
  %742 = vst.msk [vmem:[#allocation4] sm:$0xf] %vm238, %v738
  %743 = vst.msk [vmem:[#allocation4 + $0x4] sm:$0xf] %vm238, %v739
  %744 = vrot.lane.b32.xlu0 %v738, 120
  %v745 = vpop.permute.xlu0 %744
  %746 = vrot.lane.b32.xlu0 %v739, 120
  %v747 = vpop.permute.xlu0 %746
  %s750 = scalar_lea.vmem [#allocation4], 8
  %751 = vst.msk [vmem:[%s750] sm:$0xf] %vm238, %v745
  %752 = vst.msk [vmem:[%s750 + $0x4] sm:$0xf] %vm238, %v747
  %753 = vrot.lane.b32.xlu0 %v738, 112
  %v754 = vpop.permute.xlu0 %753
  %755 = vrot.lane.b32.xlu0 %v739, 112
  %v756 = vpop.permute.xlu0 %755
  %s759 = scalar_lea.vmem [#allocation4], 16
  %760 = vst.msk [vmem:[%s759] sm:$0xf] %vm238, %v754
  %761 = vst.msk [vmem:[%s759 + $0x4] sm:$0xf] %vm238, %v756
  %762 = vrot.lane.b32.xlu0 %v738, 104
  %v763 = vpop.permute.xlu0 %762
  %764 = vrot.lane.b32.xlu0 %v739, 104
  %v765 = vpop.permute.xlu0 %764
  %s768 = scalar_lea.vmem [#allocation4], 24
  %769 = vst.msk [vmem:[%s768] sm:$0xf] %vm238, %v763
  %770 = vst.msk [vmem:[%s768 + $0x4] sm:$0xf] %vm238, %v765
  loop: start=0, step=1, limit=4
  $region77: #{gat_forward.1} parent=0 // loop_pre_header
    _
  $region78: #{gat_forward.1} parent=0 // loop_header
    %s772 = sphi 0, %s776
    %p773 = scmp.ge.s32.totalorder %s772, 4
  $region79: #{gat_forward.1} parent=0 // loop_header_branch
    %775 = sbr.rel (%p773) target = $region83
  $region80: #{gat_forward.1} parent=0 // loop_body
    %v777 = vstv %s772
    %vm778 = vcmp.eq.s32.totalorder %v305, %v777
    %v779 = vsel %vm778, 1, 0
    %vm780 = vcmp.eq.s32.totalorder %v779, 1
    %783 = vrot.lane.b32.xlu0 %v697, 124
    %v784 = vpop.permute.xlu0 %783
    %785 = vrot.lane.b32.xlu0 %v700, 124
    %v786 = vpop.permute.xlu0 %785
    %v789 = vsel %vm780, %v784, 0.0
    %v790 = vsel %vm780, %v786, 0.0
    %vm791 = vcmask 31744
    %v792 = vsel %vm791, %v789, 0.0
    %793 = vadd.xlane.f32.xlu0 %v792
    %v794 = vpop.xlane.xlu0 %793
    %v795 = vsel %vm791, %v790, 0.0
    %796 = vadd.xlane.f32.xlu0 %v795
    %v797 = vpop.xlane.xlu0 %796
    %vm798 = vcmp.eq.s32.totalorder %v307, %v777
    %v799 = vsel %vm798, 1, 0
    %vm800 = vcmp.eq.s32.totalorder %v799, 1
    %v801 = vsel %vm800, %v719, 0.0
    %vm802 = vcmask 125952
    %v803 = vsel %vm802, %v801, 0.0
    %v804 = vrot.slane %v803, 4
    %v805 = vadd.f32 %v803, %v804
    %v806 = vrot.slane %v805, 2
    %v807 = vadd.f32 %v805, %v806
    %v808 = vrot.slane %v807, 1
    %v809 = vadd.f32 %v807, %v808
    %s810 = smul.u32 %s772, 2
    %s811 = smul.addr %s810, 4
    %s812 = scalar_lea.vmem [#allocation4], %s811
    %v813 = vld [vmem:[%s812] sm:$0xf]
    %v814 = vld [vmem:[%s812 + $0x4] sm:$0xf]
    %v815 = vadd.f32 %v794, %v809
    %v816 = vadd.f32 %v797, %v809
    %v817 = vmul.f32 %v815, 0.2
    %v818 = vmul.f32 %v816, 0.2
    %v819 = vmax.f32 %v815, %v817
    %v820 = vmax.f32 %v816, %v818
    %v821 = vadd.f32 %v819, %v59
    %v822 = vadd.f32 %v820, %v60
    %v823 = vsel %vm76, %v821, -inf
    %824 = vmax.xlane.f32.xlu0 %v823
    %v825 = vpop.xlane.xlu0 %824
    %v826 = vsel %vm76, %v822, -inf
    %827 = vmax.xlane.f32.xlu0 %v826
    %v828 = vpop.xlane.xlu0 %827
    %v829 = vsub.f32 %v821, %v825
    %v830 = vsub.f32 %v822, %v828
    %v831 = vmul.f32 %v829, 1.442695
    %v832 = vpow.pop %v831
    %v833 = vmul.f32 %v830, 1.442695
    %v834 = vpow.pop %v833
    %v835 = vsel %vm76, %v832, 0.0
    %836 = vadd.xlane.f32.xlu0 %v835
    %v837 = vpop.xlane.xlu0 %836
    %v838 = vsel %vm76, %v834, 0.0
    %839 = vadd.xlane.f32.xlu0 %v838
    %v840 = vpop.xlane.xlu0 %839
    %v841 = vrcp.pop %v837
    %v842 = vrcp.pop %v840
    %v843 = vpack.c.bf16 %v834, %v832
    %v846 = vunpack.c.l.b16 %v813
    %v847 = vunpack.c.l.b16 %v814
    %v848 = vpack.c.b16 %v847, %v846
    %v851 = vsel %vm76, %v843, 0
    %853 = vmatprep.subr.bf16.mxu0 0
    %854 = vmatpush1.bf16.msra.mxu0 0
    %855 = vmatprep.subr.bf16.mxu0 0
    %856 = vmatpush1.bf16.msra.mxu0 0
    %857 = vmatprep.subr.bf16.mxu0 0
    %858 = vmatpush1.bf16.msra.mxu0 0
    %859 = vmatprep.subr.bf16.mxu0 0
    %860 = vmatpush1.bf16.msra.mxu0 0
    %861 = vmatprep.subr.bf16.mxu0 0
    %862 = vmatpush1.bf16.msra.mxu0 0
    %863 = vmatprep.subr.bf16.mxu0 0
    %864 = vmatpush1.bf16.msra.mxu0 0
    %865 = vmatprep.subr.bf16.mxu0 0
    %866 = vmatpush1.bf16.msra.mxu0 0
    %867 = vmatprep.subr.bf16.mxu0 0
    %868 = vmatpush1.bf16.msra.mxu0 %v848
    %869 = vmatprep.subr.bf16.mxu0 0
    %870 = vmatpush2.bf16.msra.mxu0 0
    %871 = vmatprep.subr.bf16.mxu0 0
    %872 = vmatpush2.bf16.msra.mxu0 0
    %873 = vmatprep.subr.bf16.mxu0 0
    %874 = vmatpush2.bf16.msra.mxu0 0
    %875 = vmatprep.subr.bf16.mxu0 0
    %876 = vmatpush2.bf16.msra.mxu0 0
    %877 = vmatprep.subr.bf16.mxu0 0
    %878 = vmatpush2.bf16.msra.mxu0 0
    %879 = vmatprep.subr.bf16.mxu0 0
    %880 = vmatpush2.bf16.msra.mxu0 0
    %881 = vmatprep.subr.bf16.mxu0 0
    %882 = vmatpush2.bf16.msra.mxu0 0
    %883 = vmatprep.subr.bf16.mxu0 0
    %884 = vmatpush2.bf16.msra.mxu0 0
    %885 = vmatprep.mubr.bf16.mxu0 0
    %886 = vmatmul.mubr.bf16.gmra.mxu0 %v851
    %v887 = vpop.f32.mrf.mxu0
    %v888 = vadd.f32 0.0, %v887
    %v889 = vpop.f32.mrf.mxu0
    %v890 = vpop.f32.mrf.mxu0
    %v891 = vadd.f32 0.0, %v890
    %v892 = vpop.f32.mrf.mxu0
    %893 = vdwg.mxu0
    %v894 = vmul.f32 %v841, %v888
    %v895 = vmul.f32 %v842, %v891
    %s896 = smul.u32 %s772, 16
    %s897 = scalar_lea.vmem [#allocation5], %s896
    %898 = vst.msk [vmem:[%s897] sm:$0xff] %vm515, %v894
    %899 = vst.msk [vmem:[%s897 + $0x8] sm:$0xff] %vm515, %v895
  $region81: #{gat_forward.1} parent=0 // loop_footer
    %s776 = sadd.s32 1, %s772
  $region82: #{gat_forward.1} parent=0 // loop_footer_branch
    %771 = sbr.rel target = $region78
  $region83: #{gat_forward.1} parent=0 // loop_exit
    _
  %v900 = vld [vmem:[#allocation5] sm:$0xff]
  %v901 = vld [vmem:[#allocation5 + $0x8] sm:$0xff]
  %s902 = scalar_lea.vmem [#allocation5], 16
  %v903 = vld [vmem:[%s902] sm:$0xff]
  %v904 = vld [vmem:[%s902 + $0x8] sm:$0xff]
  %s905 = scalar_lea.vmem [#allocation5], 32
  %v906 = vld [vmem:[%s905] sm:$0xff]
  %v907 = vld [vmem:[%s905 + $0x8] sm:$0xff]
  %s908 = scalar_lea.vmem [#allocation5], 48
  %v909 = vld [vmem:[%s908] sm:$0xff]
  %v910 = vld [vmem:[%s908 + $0x8] sm:$0xff]
  %913 = vrot.lane.b32.xlu0 %v903, 8
  %v914 = vpop.permute.xlu0 %913
  %915 = vrot.lane.b32.xlu0 %v904, 8
  %v916 = vpop.permute.xlu0 %915
  %921 = vrot.lane.b32.xlu0 %v906, 16
  %v922 = vpop.permute.xlu0 %921
  %923 = vrot.lane.b32.xlu0 %v907, 16
  %v924 = vpop.permute.xlu0 %923
  %929 = vrot.lane.b32.xlu0 %v909, 24
  %v930 = vpop.permute.xlu0 %929
  %931 = vrot.lane.b32.xlu0 %v910, 24
  %v932 = vpop.permute.xlu0 %931
  %v935 = vsel %vm515, %v900, %v914
  %v936 = vsel %vm515, %v901, %v916
  %v937 = vsel %vm76, %v935, %v922
  %v938 = vsel %vm76, %v936, %v924
  %v939 = vsel %vm520, %v937, %v930
  %v940 = vsel %vm520, %v938, %v932
  %v941 = vld [vmem:[%s8] sm:$0x1]
  %v943 = vlaneseq
  %v944 = vshrl.u32 %v943, 7
  %v945 = vsub.s32 0, %v944
  %v946 = vrot.slane %v941, %v945
  %v948 = vmul.f32 %v939, %v946
  %v949 = vmul.f32 %v940, %v946
  %v950 = vld [vmem:[%s9] sm:$0x1]
  %v952 = vlaneseq
  %v953 = vshrl.u32 %v952, 7
  %v954 = vsub.s32 0, %v953
  %v955 = vrot.slane %v950, %v954
  %v957 = vadd.f32 %v948, %v955
  %v958 = vadd.f32 %v949, %v955
  %vm959 = vcmp.gt.f32.partialorder %v957, 0.0
  %vm960 = vcmp.gt.f32.partialorder %v958, 0.0
  %v961 = vmin.f32 %v957, 0.0
  %v962 = vmin.f32 %v958, 0.0
  %v963 = vmul.f32 %v961, 1.442695
  %v964 = vpow.pop %v963
  %v965 = vmul.f32 %v962, 1.442695
  %v966 = vpow.pop %v965
  %v967 = vsub.f32 %v964, 1.0
  %v968 = vsub.f32 %v966, 1.0
  %v969 = vsel %vm959, %v957, %v967
  %v970 = vsel %vm960, %v958, %v968
  %v971 = vpack.c.bf16 %v970, %v969
  %v972 = vld [vmem:[%s10] sm:$0xf]
  %v973 = vld [vmem:[%s10 + $0x4] sm:$0xf]
  %v974 = vld [vmem:[%s10 + $0x8] sm:$0xf]
  %v975 = vld [vmem:[%s10 + $0xc] sm:$0xf]
  %v980 = vunpack.c.l.b16 %v972
  %v981 = vunpack.c.l.b16 %v973
  %v982 = vunpack.c.l.b16 %v974
  %v983 = vunpack.c.l.b16 %v975
  %v984 = vpack.c.b16 %v981, %v980
  %v985 = vpack.c.b16 %v983, %v982
  %v989 = vsel %vm523, %v971, 0
  %991 = vmatprep.subr.bf16.mxu0 0
  %992 = vmatpush1.bf16.msra.mxu0 0
  %993 = vmatprep.subr.bf16.mxu0 0
  %994 = vmatpush1.bf16.msra.mxu0 0
  %995 = vmatprep.subr.bf16.mxu0 0
  %996 = vmatpush1.bf16.msra.mxu0 0
  %997 = vmatprep.subr.bf16.mxu0 0
  %998 = vmatpush1.bf16.msra.mxu0 0
  %999 = vmatprep.subr.bf16.mxu0 0
  %1000 = vmatpush1.bf16.msra.mxu0 0
  %1001 = vmatprep.subr.bf16.mxu0 0
  %1002 = vmatpush1.bf16.msra.mxu0 0
  %1003 = vmatprep.subr.bf16.mxu0 0
  %1004 = vmatpush1.bf16.msra.mxu0 %v985
  %1005 = vmatprep.subr.bf16.mxu0 0
  %1006 = vmatpush1.bf16.msra.mxu0 %v984
  %1007 = vmatprep.subr.bf16.mxu0 0
  %1008 = vmatpush2.bf16.msra.mxu0 0
  %1009 = vmatprep.subr.bf16.mxu0 0
  %1010 = vmatpush2.bf16.msra.mxu0 0
  %1011 = vmatprep.subr.bf16.mxu0 0
  %1012 = vmatpush2.bf16.msra.mxu0 0
  %1013 = vmatprep.subr.bf16.mxu0 0
  %1014 = vmatpush2.bf16.msra.mxu0 0
  %1015 = vmatprep.subr.bf16.mxu0 0
  %1016 = vmatpush2.bf16.msra.mxu0 0
  %1017 = vmatprep.subr.bf16.mxu0 0
  %1018 = vmatpush2.bf16.msra.mxu0 0
  %1019 = vmatprep.subr.bf16.mxu0 0
  %1020 = vmatpush2.bf16.msra.mxu0 0
  %1021 = vmatprep.subr.bf16.mxu0 0
  %1022 = vmatpush2.bf16.msra.mxu0 0
  %1023 = vmatprep.mubr.bf16.mxu0 0
  %1024 = vmatmul.mubr.bf16.gmra.mxu0 %v989
  %v1025 = vpop.f32.mrf.mxu0
  %v1026 = vadd.f32 0.0, %v1025
  %v1027 = vpop.f32.mrf.mxu0
  %v1028 = vpop.f32.mrf.mxu0
  %v1029 = vadd.f32 0.0, %v1028
  %v1030 = vpop.f32.mrf.mxu0
  %1031 = vdwg.mxu0
  %v1032 = vpack.c.bf16 %v1029, %v1026
  %v1033 = vld [vmem:[%s11] sm:$0xf]
  %v1034 = vld [vmem:[%s11 + $0x4] sm:$0xf]
  %v1037 = vunpack.c.l.b16 %v1033
  %v1038 = vunpack.c.l.b16 %v1034
  %v1039 = vpack.c.b16 %v1038, %v1037
  %v1042 = vsel %vm76, %v1032, 0
  %1044 = vmatprep.subr.bf16.mxu0 0
  %1045 = vmatpush1.bf16.msra.mxu0 0
  %1046 = vmatprep.subr.bf16.mxu0 0
  %1047 = vmatpush1.bf16.msra.mxu0 0
  %1048 = vmatprep.subr.bf16.mxu0 0
  %1049 = vmatpush1.bf16.msra.mxu0 0
  %1050 = vmatprep.subr.bf16.mxu0 0
  %1051 = vmatpush1.bf16.msra.mxu0 0
  %1052 = vmatprep.subr.bf16.mxu0 0
  %1053 = vmatpush1.bf16.msra.mxu0 0
  %1054 = vmatprep.subr.bf16.mxu0 0
  %1055 = vmatpush1.bf16.msra.mxu0 0
  %1056 = vmatprep.subr.bf16.mxu0 0
  %1057 = vmatpush1.bf16.msra.mxu0 0
  %1058 = vmatprep.subr.bf16.mxu0 0
  %1059 = vmatpush1.bf16.msra.mxu0 %v1039
  %1060 = vmatprep.subr.bf16.mxu0 0
  %1061 = vmatpush2.bf16.msra.mxu0 0
  %1062 = vmatprep.subr.bf16.mxu0 0
  %1063 = vmatpush2.bf16.msra.mxu0 0
  %1064 = vmatprep.subr.bf16.mxu0 0
  %1065 = vmatpush2.bf16.msra.mxu0 0
  %1066 = vmatprep.subr.bf16.mxu0 0
  %1067 = vmatpush2.bf16.msra.mxu0 0
  %1068 = vmatprep.subr.bf16.mxu0 0
  %1069 = vmatpush2.bf16.msra.mxu0 0
  %1070 = vmatprep.subr.bf16.mxu0 0
  %1071 = vmatpush2.bf16.msra.mxu0 0
  %1072 = vmatprep.subr.bf16.mxu0 0
  %1073 = vmatpush2.bf16.msra.mxu0 0
  %1074 = vmatprep.subr.bf16.mxu0 0
  %1075 = vmatpush2.bf16.msra.mxu0 0
  %1076 = vmatprep.mubr.bf16.mxu0 0
  %1077 = vmatmul.mubr.bf16.gmra.mxu0 %v1042
  %v1078 = vpop.f32.mrf.mxu0
  %v1079 = vadd.f32 0.0, %v1078
  %v1080 = vpop.f32.mrf.mxu0
  %v1081 = vpop.f32.mrf.mxu0
  %v1082 = vadd.f32 0.0, %v1081
  %v1083 = vpop.f32.mrf.mxu0
  %1084 = vdwg.mxu0
  %1085 = vxpose.xlu0.b32.start [1/16] %v1079, 128
  %1086 = vxpose.xlu0.b32.cont [2/16] %v1082, 128
  %1087 = vxpose.xlu0.b32.cont [3/16] 0.0, 128
  %1088 = vxpose.xlu0.b32.cont [4/16] 0.0, 128
  %1089 = vxpose.xlu0.b32.cont [5/16] 0.0, 128
  %1090 = vxpose.xlu0.b32.cont [6/16] 0.0, 128
  %1091 = vxpose.xlu0.b32.cont [7/16] 0.0, 128
  %1092 = vxpose.xlu0.b32.cont [8/16] 0.0, 128
  %1093 = vxpose.xlu0.b32.cont [9/16] 0.0, 128
  %1094 = vxpose.xlu0.b32.cont [10/16] 0.0, 128
  %1095 = vxpose.xlu0.b32.cont [11/16] 0.0, 128
  %1096 = vxpose.xlu0.b32.cont [12/16] 0.0, 128
  %1097 = vxpose.xlu0.b32.cont [13/16] 0.0, 128
  %1098 = vxpose.xlu0.b32.cont [14/16] 0.0, 128
  %1099 = vxpose.xlu0.b32.cont [15/16] 0.0, 128
  %1100 = vxpose.xlu0.b32.end [16/16] 0.0, 128
  %v1101 = vpop.trf.xlu0
  %v1102 = vpop.trf.xlu0
  %v1103 = vpop.trf.xlu0
  %v1104 = vpop.trf.xlu0
  %v1105 = vpop.trf.xlu0
  %v1106 = vpop.trf.xlu0
  %v1107 = vpop.trf.xlu0
  %v1108 = vpop.trf.xlu0
  %v1109 = vpop.trf.xlu0
  %v1110 = vpop.trf.xlu0
  %v1111 = vpop.trf.xlu0
  %v1112 = vpop.trf.xlu0
  %v1113 = vpop.trf.xlu0
  %v1114 = vpop.trf.xlu0
  %v1115 = vpop.trf.xlu0
  %v1116 = vpop.trf.xlu0
  %v1118 = vunpack.c.l.b16 %v1032
  %v1119 = vunpack.c.h.b16 %v1032
  %v1120 = vpack.c.b16 %v1118, %v1118
  %v1121 = vpack.c.b16 %v1119, %v1119
  %1124 = vst.msk [vmem:[#allocation6] sm:$0xf] %vm238, %v1120
  %1125 = vst.msk [vmem:[#allocation6 + $0x4] sm:$0xf] %vm238, %v1121
  %1126 = vrot.lane.b32.xlu0 %v1120, 120
  %v1127 = vpop.permute.xlu0 %1126
  %1128 = vrot.lane.b32.xlu0 %v1121, 120
  %v1129 = vpop.permute.xlu0 %1128
  %s1132 = scalar_lea.vmem [#allocation6], 8
  %1133 = vst.msk [vmem:[%s1132] sm:$0xf] %vm238, %v1127
  %1134 = vst.msk [vmem:[%s1132 + $0x4] sm:$0xf] %vm238, %v1129
  loop: start=0, step=1, limit=2
  $region84: #{gat_forward.1} parent=0 // loop_pre_header
    _
  $region85: #{gat_forward.1} parent=0 // loop_header
    %s1136 = sphi 0, %s1140
    %p1137 = scmp.ge.s32.totalorder %s1136, 2
  $region86: #{gat_forward.1} parent=0 // loop_header_branch
    %1139 = sbr.rel (%p1137) target = $region90
  $region87: #{gat_forward.1} parent=0 // loop_body
    %v1141 = vstv %s1136
    %vm1142 = vcmp.eq.s32.totalorder %v305, %v1141
    %v1143 = vsel %vm1142, 1, 0
    %vm1144 = vcmp.eq.s32.totalorder %v1143, 1
    %1147 = vrot.lane.b32.xlu0 %v1079, 126
    %v1148 = vpop.permute.xlu0 %1147
    %1149 = vrot.lane.b32.xlu0 %v1082, 126
    %v1150 = vpop.permute.xlu0 %1149
    %v1153 = vsel %vm1144, %v1148, 0.0
    %v1154 = vsel %vm1144, %v1150, 0.0
    %vm1155 = vcmask 15360
    %v1156 = vsel %vm1155, %v1153, 0.0
    %1157 = vadd.xlane.f32.xlu0 %v1156
    %v1158 = vpop.xlane.xlu0 %1157
    %v1159 = vsel %vm1155, %v1154, 0.0
    %1160 = vadd.xlane.f32.xlu0 %v1159
    %v1161 = vpop.xlane.xlu0 %1160
    %vm1162 = vcmp.eq.s32.totalorder %v307, %v1141
    %v1163 = vsel %vm1162, 1, 0
    %vm1164 = vcmp.eq.s32.totalorder %v1163, 1
    %v1165 = vsel %vm1164, %v1101, 0.0
    %vm1166 = vcmask 123904
    %v1167 = vsel %vm1166, %v1165, 0.0
    %v1168 = vrot.slane %v1167, 4
    %v1169 = vadd.f32 %v1167, %v1168
    %v1170 = vrot.slane %v1169, 2
    %v1171 = vadd.f32 %v1169, %v1170
    %v1172 = vrot.slane %v1171, 1
    %v1173 = vadd.f32 %v1171, %v1172
    %s1174 = smul.u32 %s1136, 2
    %s1175 = smul.addr %s1174, 4
    %s1176 = scalar_lea.vmem [#allocation6], %s1175
    %v1177 = vld [vmem:[%s1176] sm:$0xf]
    %v1178 = vld [vmem:[%s1176 + $0x4] sm:$0xf]
    %v1179 = vadd.f32 %v1158, %v1173
    %v1180 = vadd.f32 %v1161, %v1173
    %v1181 = vmul.f32 %v1179, 0.2
    %v1182 = vmul.f32 %v1180, 0.2
    %v1183 = vmax.f32 %v1179, %v1181
    %v1184 = vmax.f32 %v1180, %v1182
    %v1185 = vadd.f32 %v1183, %v59
    %v1186 = vadd.f32 %v1184, %v60
    %v1187 = vsel %vm76, %v1185, -inf
    %1188 = vmax.xlane.f32.xlu0 %v1187
    %v1189 = vpop.xlane.xlu0 %1188
    %v1190 = vsel %vm76, %v1186, -inf
    %1191 = vmax.xlane.f32.xlu0 %v1190
    %v1192 = vpop.xlane.xlu0 %1191
    %v1193 = vsub.f32 %v1185, %v1189
    %v1194 = vsub.f32 %v1186, %v1192
    %v1195 = vmul.f32 %v1193, 1.442695
    %v1196 = vpow.pop %v1195
    %v1197 = vmul.f32 %v1194, 1.442695
    %v1198 = vpow.pop %v1197
    %v1199 = vsel %vm76, %v1196, 0.0
    %1200 = vadd.xlane.f32.xlu0 %v1199
    %v1201 = vpop.xlane.xlu0 %1200
    %v1202 = vsel %vm76, %v1198, 0.0
    %1203 = vadd.xlane.f32.xlu0 %v1202
    %v1204 = vpop.xlane.xlu0 %1203
    %v1205 = vrcp.pop %v1201
    %v1206 = vrcp.pop %v1204
    %v1207 = vpack.c.bf16 %v1198, %v1196
    %v1210 = vunpack.c.l.b16 %v1177
    %v1211 = vunpack.c.l.b16 %v1178
    %v1212 = vpack.c.b16 %v1211, %v1210
    %v1215 = vsel %vm76, %v1207, 0
    %1217 = vmatprep.subr.bf16.mxu0 0
    %1218 = vmatpush1.bf16.msra.mxu0 0
    %1219 = vmatprep.subr.bf16.mxu0 0
    %1220 = vmatpush1.bf16.msra.mxu0 0
    %1221 = vmatprep.subr.bf16.mxu0 0
    %1222 = vmatpush1.bf16.msra.mxu0 0
    %1223 = vmatprep.subr.bf16.mxu0 0
    %1224 = vmatpush1.bf16.msra.mxu0 0
    %1225 = vmatprep.subr.bf16.mxu0 0
    %1226 = vmatpush1.bf16.msra.mxu0 0
    %1227 = vmatprep.subr.bf16.mxu0 0
    %1228 = vmatpush1.bf16.msra.mxu0 0
    %1229 = vmatprep.subr.bf16.mxu0 0
    %1230 = vmatpush1.bf16.msra.mxu0 0
    %1231 = vmatprep.subr.bf16.mxu0 0
    %1232 = vmatpush1.bf16.msra.mxu0 %v1212
    %1233 = vmatprep.subr.bf16.mxu0 0
    %1234 = vmatpush2.bf16.msra.mxu0 0
    %1235 = vmatprep.subr.bf16.mxu0 0
    %1236 = vmatpush2.bf16.msra.mxu0 0
    %1237 = vmatprep.subr.bf16.mxu0 0
    %1238 = vmatpush2.bf16.msra.mxu0 0
    %1239 = vmatprep.subr.bf16.mxu0 0
    %1240 = vmatpush2.bf16.msra.mxu0 0
    %1241 = vmatprep.subr.bf16.mxu0 0
    %1242 = vmatpush2.bf16.msra.mxu0 0
    %1243 = vmatprep.subr.bf16.mxu0 0
    %1244 = vmatpush2.bf16.msra.mxu0 0
    %1245 = vmatprep.subr.bf16.mxu0 0
    %1246 = vmatpush2.bf16.msra.mxu0 0
    %1247 = vmatprep.subr.bf16.mxu0 0
    %1248 = vmatpush2.bf16.msra.mxu0 0
    %1249 = vmatprep.mubr.bf16.mxu0 0
    %1250 = vmatmul.mubr.bf16.gmra.mxu0 %v1215
    %v1251 = vpop.f32.mrf.mxu0
    %v1252 = vadd.f32 0.0, %v1251
    %v1253 = vpop.f32.mrf.mxu0
    %v1254 = vpop.f32.mrf.mxu0
    %v1255 = vadd.f32 0.0, %v1254
    %v1256 = vpop.f32.mrf.mxu0
    %1257 = vdwg.mxu0
    %v1258 = vmul.f32 %v1205, %v1252
    %v1259 = vmul.f32 %v1206, %v1255
    %s1260 = smul.u32 %s1136, 16
    %s1261 = scalar_lea.vmem [#allocation7], %s1260
    %1262 = vst.msk [vmem:[%s1261] sm:$0xff] %vm515, %v1258
    %1263 = vst.msk [vmem:[%s1261 + $0x8] sm:$0xff] %vm515, %v1259
  $region88: #{gat_forward.1} parent=0 // loop_footer
    %s1140 = sadd.s32 1, %s1136
  $region89: #{gat_forward.1} parent=0 // loop_footer_branch
    %1135 = sbr.rel target = $region85
  $region90: #{gat_forward.1} parent=0 // loop_exit
    _
  %v1264 = vld [vmem:[#allocation7] sm:$0xff]
  %v1265 = vld [vmem:[#allocation7 + $0x8] sm:$0xff]
  %s1266 = scalar_lea.vmem [#allocation7], 16
  %v1267 = vld [vmem:[%s1266] sm:$0xff]
  %v1268 = vld [vmem:[%s1266 + $0x8] sm:$0xff]
  %1271 = vrot.lane.b32.xlu0 %v1267, 8
  %v1272 = vpop.permute.xlu0 %1271
  %1273 = vrot.lane.b32.xlu0 %v1268, 8
  %v1274 = vpop.permute.xlu0 %1273
  %v1277 = vsel %vm515, %v1264, %v1272
  %v1278 = vsel %vm515, %v1265, %v1274
  %v1279 = vld [vmem:[%s12] sm:$0x1]
  %v1281 = vlaneseq
  %v1282 = vshrl.u32 %v1281, 7
  %v1283 = vsub.s32 0, %v1282
  %v1284 = vrot.slane %v1279, %v1283
  %v1286 = vmul.f32 %v1277, %v1284
  %v1287 = vmul.f32 %v1278, %v1284
  %v1288 = vld [vmem:[%s13] sm:$0x1]
  %v1290 = vlaneseq
  %v1291 = vshrl.u32 %v1290, 7
  %v1292 = vsub.s32 0, %v1291
  %v1293 = vrot.slane %v1288, %v1292
  %v1295 = vadd.f32 %v1286, %v1293
  %v1296 = vadd.f32 %v1287, %v1293
  %vm1297 = vcmp.gt.f32.partialorder %v1295, 0.0
  %vm1298 = vcmp.gt.f32.partialorder %v1296, 0.0
  %v1299 = vmin.f32 %v1295, 0.0
  %v1300 = vmin.f32 %v1296, 0.0
  %v1301 = vmul.f32 %v1299, 1.442695
  %v1302 = vpow.pop %v1301
  %v1303 = vmul.f32 %v1300, 1.442695
  %v1304 = vpow.pop %v1303
  %v1305 = vsub.f32 %v1302, 1.0
  %v1306 = vsub.f32 %v1304, 1.0
  %v1307 = vsel %vm1297, %v1295, %v1305
  %v1308 = vsel %vm1298, %v1296, %v1306
  %v1309 = vpack.c.bf16 %v1308, %v1307
  %v1310 = vld [vmem:[%s14] sm:$0xf]
  %v1311 = vld [vmem:[%s14 + $0x4] sm:$0xf]
  %v1314 = vunpack.c.l.b16 %v1310
  %v1315 = vunpack.c.l.b16 %v1311
  %v1316 = vpack.c.b16 %v1315, %v1314
  %v1319 = vsel %vm76, %v1309, 0
  %1321 = vmatprep.subr.bf16.mxu0 0
  %1322 = vmatpush1.bf16.msra.mxu0 0
  %1323 = vmatprep.subr.bf16.mxu0 0
  %1324 = vmatpush1.bf16.msra.mxu0 0
  %1325 = vmatprep.subr.bf16.mxu0 0
  %1326 = vmatpush1.bf16.msra.mxu0 0
  %1327 = vmatprep.subr.bf16.mxu0 0
  %1328 = vmatpush1.bf16.msra.mxu0 0
  %1329 = vmatprep.subr.bf16.mxu0 0
  %1330 = vmatpush1.bf16.msra.mxu0 0
  %1331 = vmatprep.subr.bf16.mxu0 0
  %1332 = vmatpush1.bf16.msra.mxu0 0
  %1333 = vmatprep.subr.bf16.mxu0 0
  %1334 = vmatpush1.bf16.msra.mxu0 0
  %1335 = vmatprep.subr.bf16.mxu0 0
  %1336 = vmatpush1.bf16.msra.mxu0 %v1316
  %1337 = vmatprep.subr.bf16.mxu0 0
  %1338 = vmatpush2.bf16.msra.mxu0 0
  %1339 = vmatprep.subr.bf16.mxu0 0
  %1340 = vmatpush2.bf16.msra.mxu0 0
  %1341 = vmatprep.subr.bf16.mxu0 0
  %1342 = vmatpush2.bf16.msra.mxu0 0
  %1343 = vmatprep.subr.bf16.mxu0 0
  %1344 = vmatpush2.bf16.msra.mxu0 0
  %1345 = vmatprep.subr.bf16.mxu0 0
  %1346 = vmatpush2.bf16.msra.mxu0 0
  %1347 = vmatprep.subr.bf16.mxu0 0
  %1348 = vmatpush2.bf16.msra.mxu0 0
  %1349 = vmatprep.subr.bf16.mxu0 0
  %1350 = vmatpush2.bf16.msra.mxu0 0
  %1351 = vmatprep.subr.bf16.mxu0 0
  %1352 = vmatpush2.bf16.msra.mxu0 0
  %1353 = vmatprep.mubr.bf16.mxu0 0
  %1354 = vmatmul.mubr.bf16.gmra.mxu0 %v1319
  %v1355 = vpop.f32.mrf.mxu0
  %v1356 = vadd.f32 0.0, %v1355
  %v1357 = vpop.f32.mrf.mxu0
  %v1358 = vpop.f32.mrf.mxu0
  %v1359 = vadd.f32 0.0, %v1358
  %v1360 = vpop.f32.mrf.mxu0
  %1361 = vdwg.mxu0
  %v1362 = vpack.c.bf16 %v1359, %v1356
  %v1363 = vld [vmem:[%s15] sm:$0x3]
  %vm1364 = vcmask 31744
  %v1366 = vsel %vm1364, %v1362, 0
  %vm1368 = vcmask 1041408
  %v1370 = vsel %vm1368, %v1363, 0
  %1372 = vmatprep.subr.bf16.mxu0 0
  %1373 = vmatpush1.bf16.msra.mxu0 0
  %1374 = vmatprep.subr.bf16.mxu0 0
  %1375 = vmatpush1.bf16.msra.mxu0 0
  %1376 = vmatprep.subr.bf16.mxu0 0
  %1377 = vmatpush1.bf16.msra.mxu0 0
  %1378 = vmatprep.subr.bf16.mxu0 0
  %1379 = vmatpush1.bf16.msra.mxu0 0
  %1380 = vmatprep.subr.bf16.mxu0 0
  %1381 = vmatpush1.bf16.msra.mxu0 0
  %1382 = vmatprep.subr.bf16.mxu0 0
  %1383 = vmatpush1.bf16.msra.mxu0 0
  %1384 = vmatprep.subr.bf16.mxu0 0
  %1385 = vmatpush1.bf16.msra.mxu0 0
  %1386 = vmatprep.subr.bf16.mxu0 0
  %1387 = vmatpush1.bf16.msra.mxu0 %v1370
  %1388 = vmatprep.subr.bf16.mxu0 0
  %1389 = vmatpush2.bf16.msra.mxu0 0
  %1390 = vmatprep.subr.bf16.mxu0 0
  %1391 = vmatpush2.bf16.msra.mxu0 0
  %1392 = vmatprep.subr.bf16.mxu0 0
  %1393 = vmatpush2.bf16.msra.mxu0 0
  %1394 = vmatprep.subr.bf16.mxu0 0
  %1395 = vmatpush2.bf16.msra.mxu0 0
  %1396 = vmatprep.subr.bf16.mxu0 0
  %1397 = vmatpush2.bf16.msra.mxu0 0
  %1398 = vmatprep.subr.bf16.mxu0 0
  %1399 = vmatpush2.bf16.msra.mxu0 0
  %1400 = vmatprep.subr.bf16.mxu0 0
  %1401 = vmatpush2.bf16.msra.mxu0 0
  %1402 = vmatprep.subr.bf16.mxu0 0
  %1403 = vmatpush2.bf16.msra.mxu0 0
  %1404 = vmatprep.mubr.bf16.mxu0 0
  %1405 = vmatmul.mubr.bf16.gmra.mxu0 %v1366
  %v1406 = vpop.f32.mrf.mxu0
  %v1407 = vadd.f32 0.0, %v1406
  %v1408 = vpop.f32.mrf.mxu0
  %v1409 = vpop.f32.mrf.mxu0
  %v1410 = vadd.f32 0.0, %v1409
  %v1411 = vpop.f32.mrf.mxu0
  %1412 = vdwg.mxu0
  %1413 = vxpose.xlu0.b32.start [1/16] %v1407, 128
  %1414 = vxpose.xlu0.b32.cont [2/16] %v1410, 128
  %1415 = vxpose.xlu0.b32.cont [3/16] 0.0, 128
  %1416 = vxpose.xlu0.b32.cont [4/16] 0.0, 128
  %1417 = vxpose.xlu0.b32.cont [5/16] 0.0, 128
  %1418 = vxpose.xlu0.b32.cont [6/16] 0.0, 128
  %1419 = vxpose.xlu0.b32.cont [7/16] 0.0, 128
  %1420 = vxpose.xlu0.b32.cont [8/16] 0.0, 128
  %1421 = vxpose.xlu0.b32.cont [9/16] 0.0, 128
  %1422 = vxpose.xlu0.b32.cont [10/16] 0.0, 128
  %1423 = vxpose.xlu0.b32.cont [11/16] 0.0, 128
  %1424 = vxpose.xlu0.b32.cont [12/16] 0.0, 128
  %1425 = vxpose.xlu0.b32.cont [13/16] 0.0, 128
  %1426 = vxpose.xlu0.b32.cont [14/16] 0.0, 128
  %1427 = vxpose.xlu0.b32.cont [15/16] 0.0, 128
  %1428 = vxpose.xlu0.b32.end [16/16] 0.0, 128
  %v1429 = vpop.trf.xlu0
  %v1430 = vpop.trf.xlu0
  %v1431 = vpop.trf.xlu0
  %v1432 = vpop.trf.xlu0
  %v1433 = vpop.trf.xlu0
  %v1434 = vpop.trf.xlu0
  %v1435 = vpop.trf.xlu0
  %v1436 = vpop.trf.xlu0
  %v1437 = vpop.trf.xlu0
  %v1438 = vpop.trf.xlu0
  %v1439 = vpop.trf.xlu0
  %v1440 = vpop.trf.xlu0
  %v1441 = vpop.trf.xlu0
  %v1442 = vpop.trf.xlu0
  %v1443 = vpop.trf.xlu0
  %v1444 = vpop.trf.xlu0
  %1446 = vset.pattern.permute.xlu0 1
  %1447 = vperm.xlu0 %1446, %v1407
  %v1448 = vpop.permute.xlu0 %1447
  %1451 = vset.pattern.permute.xlu0 1
  %1452 = vperm.xlu0 %1451, %v1410
  %v1453 = vpop.permute.xlu0 %1452
  %v1455 = vlaneseq
  %v1456 = vshrl.u32 %v1455, 7
  %v1457 = vsub.s32 0, %v1456
  %v1458 = vrot.slane %v1429, %v1457
  %v1459 = vadd.f32 %v1448, %v1458
  %v1460 = vadd.f32 %v1453, %v1458
  %v1461 = vmul.f32 %v1459, 0.2
  %v1462 = vmul.f32 %v1460, 0.2
  %v1463 = vmax.f32 %v1459, %v1461
  %v1464 = vmax.f32 %v1460, %v1462
  %v1465 = vadd.f32 %v1463, %v59
  %v1466 = vadd.f32 %v1464, %v60
  %v1467 = vsel %vm76, %v1465, -inf
  %1468 = vmax.xlane.f32.xlu0 %v1467
  %v1469 = vpop.xlane.xlu0 %1468
  %v1470 = vsel %vm76, %v1466, -inf
  %1471 = vmax.xlane.f32.xlu0 %v1470
  %v1472 = vpop.xlane.xlu0 %1471
  %v1473 = vsub.f32 %v1465, %v1469
  %v1474 = vsub.f32 %v1466, %v1472
  %v1475 = vmul.f32 %v1473, 1.442695
  %v1476 = vpow.pop %v1475
  %v1477 = vmul.f32 %v1474, 1.442695
  %v1478 = vpow.pop %v1477
  %v1479 = vsel %vm76, %v1476, 0.0
  %1480 = vadd.xlane.f32.xlu0 %v1479
  %v1481 = vpop.xlane.xlu0 %1480
  %v1482 = vsel %vm76, %v1478, 0.0
  %1483 = vadd.xlane.f32.xlu0 %v1482
  %v1484 = vpop.xlane.xlu0 %1483
  %v1485 = vrcp.pop %v1481
  %v1486 = vrcp.pop %v1484
  %v1487 = vpack.c.bf16 %v1478, %v1476
  %v1489 = vsel %vm76, %v1487, 0
  %1491 = vmatprep.subr.bf16.mxu0 0
  %1492 = vmatpush1.bf16.msra.mxu0 0
  %1493 = vmatprep.subr.bf16.mxu0 0
  %1494 = vmatpush1.bf16.msra.mxu0 0
  %1495 = vmatprep.subr.bf16.mxu0 0
  %1496 = vmatpush1.bf16.msra.mxu0 0
  %1497 = vmatprep.subr.bf16.mxu0 0
  %1498 = vmatpush1.bf16.msra.mxu0 0
  %1499 = vmatprep.subr.bf16.mxu0 0
  %1500 = vmatpush1.bf16.msra.mxu0 0
  %1501 = vmatprep.subr.bf16.mxu0 0
  %1502 = vmatpush1.bf16.msra.mxu0 0
  %1503 = vmatprep.subr.bf16.mxu0 0
  %1504 = vmatpush1.bf16.msra.mxu0 0
  %1505 = vmatprep.subr.bf16.mxu0 0
  %1506 = vmatpush1.bf16.msra.mxu0 %v1362
  %1507 = vmatprep.subr.bf16.mxu0 0
  %1508 = vmatpush2.bf16.msra.mxu0 0
  %1509 = vmatprep.subr.bf16.mxu0 0
  %1510 = vmatpush2.bf16.msra.mxu0 0
  %1511 = vmatprep.subr.bf16.mxu0 0
  %1512 = vmatpush2.bf16.msra.mxu0 0
  %1513 = vmatprep.subr.bf16.mxu0 0
  %1514 = vmatpush2.bf16.msra.mxu0 0
  %1515 = vmatprep.subr.bf16.mxu0 0
  %1516 = vmatpush2.bf16.msra.mxu0 0
  %1517 = vmatprep.subr.bf16.mxu0 0
  %1518 = vmatpush2.bf16.msra.mxu0 0
  %1519 = vmatprep.subr.bf16.mxu0 0
  %1520 = vmatpush2.bf16.msra.mxu0 0
  %1521 = vmatprep.subr.bf16.mxu0 0
  %1522 = vmatpush2.bf16.msra.mxu0 0
  %1523 = vmatprep.mubr.bf16.mxu0 0
  %1524 = vmatmul.mubr.bf16.gmra.mxu0 %v1489
  %v1525 = vpop.f32.mrf.mxu0
  %v1526 = vadd.f32 0.0, %v1525
  %v1527 = vpop.f32.mrf.mxu0
  %v1528 = vpop.f32.mrf.mxu0
  %v1529 = vadd.f32 0.0, %v1528
  %v1530 = vpop.f32.mrf.mxu0
  %1531 = vdwg.mxu0
  %v1532 = vmul.f32 %v1485, %v1526
  %v1533 = vmul.f32 %v1486, %v1529
  %v1534 = vld [vmem:[%s16] sm:$0x1]
  %v1536 = vlaneseq
  %v1537 = vshrl.u32 %v1536, 7
  %v1538 = vsub.s32 0, %v1537
  %v1539 = vrot.slane %v1534, %v1538
  %v1541 = vadd.f32 %v1532, %v1539
  %v1542 = vadd.f32 %v1533, %v1539
  %v1543 = vsel %vm1364, %v1541, -inf
  %1544 = vmax.xlane.f32.xlu0 %v1543
  %v1545 = vpop.xlane.xlu0 %1544
  %v1546 = vsel %vm1364, %v1542, -inf
  %1547 = vmax.xlane.f32.xlu0 %v1546
  %v1548 = vpop.xlane.xlu0 %1547
  %v1549 = vsub.f32 %v1541, %v1545
  %v1550 = vsub.f32 %v1542, %v1548
  %v1551 = vmul.f32 %v1549, 1.442695
  %v1552 = vpow.pop %v1551
  %v1553 = vmul.f32 %v1550, 1.442695
  %v1554 = vpow.pop %v1553
  %v1555 = vsel %vm1364, %v1552, 0.0
  %1556 = vadd.xlane.f32.xlu0 %v1555
  %v1557 = vpop.xlane.xlu0 %1556
  %v1558 = vsel %vm1364, %v1554, 0.0
  %1559 = vadd.xlane.f32.xlu0 %v1558
  %v1560 = vpop.xlane.xlu0 %1559
  %v1561 = vlog2.pop %v1557
  %v1562 = vmul.f32 %v1561, 0.6931472
  %v1563 = vlog2.pop %v1560
  %v1564 = vmul.f32 %v1563, 0.6931472
  %v1565 = vsub.f32 %v1549, %v1562
  %v1566 = vsub.f32 %v1550, %v1564
  %1567 = vst.msk [vmem:[%s17] sm:$0xff] %vm1364, %v1565
  %1568 = vst.msk [vmem:[%s17 + $0x8] sm:$0xff] %vm1364, %v1566
  // Predicated region
  $region91: #{gat_forward.1} parent=0 // pred_check
    _
  $region92: #{gat_forward.1} parent=0 // pred_check_branch
    %1570 = sbr.rel (0) target = $region94
  $region93: #{gat_forward.1} parent=0 // pred_region
    _
  $region94: #{gat_forward.1} parent=0 // pred_fallthru
    _
  // Predicated region
  $region95: #{gat_forward.1} parent=0 // pred_check
    _
  $region96: #{gat_forward.1} parent=0 // pred_check_branch
    %1572 = sbr.rel (0) target = $region98
  $region97: #{gat_forward.1} parent=0 // pred_region
    _
  $region98: #{gat_forward.1} parent=0 // pred_fallthru
    _

</llo_original>
